<compile_context>
chip_gen: v7x
topology: tpu7x:2x2x1
jax: 0.10.0
libtpu: 0.0.40
codegen_flags: <defaults>
</compile_context>

<pallas_src>
import jax
import jax.numpy as jnp
import numpy as np
from jax import lax
from jax.experimental import pallas as pl
from jax.experimental.pallas import tpu as pltpu

INPUT_LEN = 32      # input_length
OUTPUT_LEN = 8      # output_length


def _get_conv_out(n, k, s, d=1):
    return (n - d * (k - 1) - 1) // s + 1


C1_OUT = _get_conv_out(INPUT_LEN, 4, 4)            # conv1_1 output length (8)
C12_OUT = _get_conv_out(C1_OUT, 5, 4)              # conv1_2 output length (1)
C2_OUT = _get_conv_out(INPUT_LEN, 5, 1, 4)         # conv2_1 output length (16)
C22_OUT = _get_conv_out(C2_OUT, 4, 4)              # conv2_2 output length (4)
FLAT1 = 24 * C12_OUT                               # 24
FLAT2 = 24 * C22_OUT                               # 96
FC1_IN = FLAT1 + FLAT2 + INPUT_LEN                 # 152

H_COLS = 32 * (C1_OUT + C2_OUT)                    # 768  (conv1_1 | conv2_1 feature cols)
MID_COLS = 128                                     # FLAT1+FLAT2 = 120, padded to 128 lanes
FC_PAD = 128                                       # all FC layers padded to 128x128


def _elu(v):
    # torch.nn.functional.elu with alpha=1 (f32 elementwise: safe on all TPU gens)
    return jnp.where(v > 0, v, jnp.exp(v) - 1.0)


# ----------------------------------------------------------------------------
# Kernel: one batch tile per grid step, 7 bf16 matmuls with f32 accumulation.
# ----------------------------------------------------------------------------
def model_kernel(x_ref, wbig_ref, bbig_ref, wmid_ref, bmid_ref,
                 wf1a_ref, wf1c_ref, bf1_ref, wstk_ref, bstk_ref, out_ref):
    f32 = jnp.float32
    bf16 = jnp.bfloat16
    x = x_ref[...].astype(bf16)                                        # (TB, 32) raw input

    # conv1_1 + conv2_1 (input normalization folded into wbig/bbig)
    h = _elu(jnp.dot(x, wbig_ref[...], preferred_element_type=f32)
             + bbig_ref[...])                                          # (TB, 768) f32

    # conv1_2 + conv2_2 as one block-structured matmul -> [x1 | x2 | pad]
    xm = _elu(jnp.dot(h.astype(bf16), wmid_ref[...], preferred_element_type=f32)
              + bmid_ref[...])                                         # (TB, 128) f32

    # fc1 over concat([x1, x2, x]) expressed as two matmuls
    z = _elu(jnp.dot(xm.astype(bf16), wf1a_ref[...], preferred_element_type=f32)
             + jnp.dot(x, wf1c_ref[...], preferred_element_type=f32)
             + bf1_ref[...])                                           # (TB, 128) f32

    # fc2, fc3, fc4, output — zero-padded to (128, 128); padded lanes stay 0
    for i in range(4):
        z = _elu(jnp.dot(z.astype(bf16), wstk_ref[i], preferred_element_type=f32)
                 + bstk_ref[i])

    out_ref[...] = z.astype(out_ref.dtype)                             # lane-dense (TB, 128) bf16


# ----------------------------------------------------------------------------
# Wrapper-side weight fusion (plain JAX glue, done once per call / trace).
# ----------------------------------------------------------------------------
def _build_fused_params(p):
    f32 = jnp.float32
    bf16 = jnp.bfloat16
    mean = p["X_mean"].astype(f32)
    std = p["X_std"].astype(f32)
    mos = mean / std

    # --- conv1_1 (k=4, s=4) and conv2_1 (k=5, s=1, d=4) as one (32, 768) weight.
    #     H column layout: [t*32 + o] for branch1 (t=0..7), then branch2 (t=0..15).
    w11 = p["c11_w"][:, 0, :]                                          # (32, 4)  [o, k]
    T, K, O = jnp.meshgrid(jnp.arange(C1_OUT), jnp.arange(4), jnp.arange(32),
                           indexing="ij")
    w1big = jnp.zeros((INPUT_LEN, 32 * C1_OUT), f32).at[
        (4 * T + K).ravel(), (32 * T + O).ravel()].set(w11[O, K].ravel())

    w21 = p["c21_w"][:, 0, :]                                          # (32, 5)  [o, k]
    T, K, O = jnp.meshgrid(jnp.arange(C2_OUT), jnp.arange(5), jnp.arange(32),
                           indexing="ij")
    w2big = jnp.zeros((INPUT_LEN, 32 * C2_OUT), f32).at[
        (T + 4 * K).ravel(), (32 * T + O).ravel()].set(w21[O, K].ravel())

    wbig = jnp.concatenate([w1big, w2big], axis=1)                     # (32, 768)
    bbig = jnp.concatenate([jnp.tile(p["c11_b"], C1_OUT),
                            jnp.tile(p["c21_b"], C2_OUT)])[None, :]    # (1, 768)
    # fold (x - mean)/std into the first layer
    bbig = bbig - (mos[:, None] * wbig).sum(axis=0, keepdims=True)
    wbig = wbig / std[:, None]

    # --- conv1_2 (k=5, s=4) and conv2_2 (k=4, s=4) as one (768, 128) weight.
    #     Output columns: [0..23] = x1 channels, [24 + t*24 + c] = x2, rest pad.
    w12 = jnp.transpose(p["c12_w"], (2, 1, 0)).reshape(5 * 32, 24)     # (160, 24)
    w22 = jnp.transpose(p["c22_w"], (2, 1, 0)).reshape(4 * 32, 24)     # (128, 24)
    wmid = jnp.zeros((H_COLS, MID_COLS), f32)
    wmid = wmid.at[:5 * 32, :FLAT1].set(w12)
    wmid = wmid.at[32 * C1_OUT:, FLAT1:FLAT1 + FLAT2].set(
        jnp.kron(jnp.eye(C22_OUT, dtype=f32), w22))                    # block diagonal
    bmid = jnp.zeros((1, MID_COLS), f32)
    bmid = bmid.at[0, :FLAT1].set(p["c12_b"])
    bmid = bmid.at[0, FLAT1:FLAT1 + FLAT2].set(jnp.tile(p["c22_b"], C22_OUT))

    # --- fc1, split into the [x1|x2] part (permuted to torch flatten order) and
    #     the raw-input part (with normalization folded in); padded to 128 lanes.
    fc1_wT = p["fc1_w"].T                                              # (152, 64)
    wf1a = jnp.zeros((MID_COLS, FC_PAD), f32)
    wf1a = wf1a.at[:FLAT1, :64].set(fc1_wT[:FLAT1])
    x2_rows = fc1_wT[FLAT1:FLAT1 + FLAT2].reshape(24, C22_OUT, 64)     # [c, l, :]
    x2_rows = jnp.transpose(x2_rows, (1, 0, 2)).reshape(FLAT2, 64)     # row = l*24 + c
    wf1a = wf1a.at[FLAT1:FLAT1 + FLAT2, :64].set(x2_rows)

    wf1c = jnp.zeros((INPUT_LEN, FC_PAD), f32).at[:, :64].set(fc1_wT[FLAT1 + FLAT2:])
    bf1 = jnp.zeros((1, FC_PAD), f32).at[0, :64].set(p["fc1_b"])
    bf1 = bf1 - (mos[:, None] * wf1c).sum(axis=0, keepdims=True)
    wf1c = wf1c / std[:, None]

    # --- fc2 / fc3 / fc4 / output stacked as zero-padded (4, 128, 128) matmuls.
    def pad_layer(w, b):
        wT = w.T
        wp = jnp.zeros((FC_PAD, FC_PAD), f32).at[:wT.shape[0], :wT.shape[1]].set(wT)
        bp = jnp.zeros((1, FC_PAD), f32).at[0, :b.shape[0]].set(b)
        return wp, bp

    layers = [pad_layer(p["fc2_w"], p["fc2_b"]),
              pad_layer(p["fc3_w"], p["fc3_b"]),
              pad_layer(p["fc4_w"], p["fc4_b"]),
              pad_layer(p["out_w"], p["out_b"])]
    wstk = jnp.stack([w for w, _ in layers])                           # (4, 128, 128)
    bstk = jnp.stack([b for _, b in layers])                           # (4, 1, 128)

    # Weight matrices -> bf16 (MXU-native); biases stay f32 (added to f32 acc).
    return (wbig.astype(bf16), bbig, wmid.astype(bf16), bmid,
            wf1a.astype(bf16), wf1c.astype(bf16), bf1,
            wstk.astype(bf16), bstk)


def model_n2n_forward(x, p):
    """x: (B, INPUT_LEN) float32 -> (B, OUTPUT_LEN) float32."""
    B, L = x.shape
    assert L == INPUT_LEN
    fused = _build_fused_params(p)

    # Batch tiling: minimize padding and keep grid >= 2 (v7x dual-TC sharding).
    # 16-row alignment keeps bf16 (16, 128) sublane tiling legal for the output.
    TB_MAX = 512
    n_steps = max(2, -(-B // TB_MAX))
    TB = -(-B // n_steps)
    TB = ((TB + 15) // 16) * 16
    Bp = TB * n_steps
    xp = jnp.pad(x.astype(jnp.float32), ((0, Bp - B), (0, 0)))

    def full_spec(shape):
        nd = len(shape)
        # Constant index map: Mosaic skips the re-DMA when the block index is
        # unchanged across grid steps, so these stay resident in VMEM.
        return pl.BlockSpec(tuple(shape), lambda b, _n=nd: (0,) * _n)

    in_specs = ([pl.BlockSpec((TB, INPUT_LEN), lambda b: (b, 0))]
                + [full_spec(a.shape) for a in fused])
    out_specs = pl.BlockSpec((TB, FC_PAD), lambda b: (b, 0))

    out = pl.pallas_call(
        model_kernel,
        out_shape=jax.ShapeDtypeStruct((Bp, FC_PAD), jnp.bfloat16),
        grid_spec=pltpu.PrefetchScalarGridSpec(
            num_scalar_prefetch=0,
            grid=(n_steps,),
            in_specs=in_specs,
            out_specs=out_specs),
        compiler_params=pltpu.CompilerParams(
            dimension_semantics=("parallel",),
            vmem_limit_bytes=32 * 1024 * 1024),
    )(xp, *fused)
    return out[:B, :OUTPUT_LEN].astype(jnp.float32)


# ----------------------------------------------------------------------------
# Synthetic parameters + plain-JAX reference for checking.
# ----------------------------------------------------------------------------
def init_params(key):
    """Deterministic synthetic params with the shapes implied by ModelN2n.__init__."""
    ks = jax.random.split(key, 20)

    def u(k, shape, fan_in):
        bound = 1.0 / np.sqrt(fan_in)
        return jax.random.uniform(k, shape, jnp.float32, -bound, bound)

    p = {}
    p["c11_w"] = u(ks[0], (32, 1, 4), 4);          p["c11_b"] = u(ks[1], (32,), 4)
    p["c12_w"] = u(ks[2], (24, 32, 5), 160);       p["c12_b"] = u(ks[3], (24,), 160)
    p["c21_w"] = u(ks[4], (32, 1, 5), 5);          p["c21_b"] = u(ks[5], (32,), 5)
    p["c22_w"] = u(ks[6], (24, 32, 4), 128);       p["c22_b"] = u(ks[7], (24,), 128)
    p["fc1_w"] = u(ks[8], (64, FC1_IN), FC1_IN);   p["fc1_b"] = u(ks[9], (64,), FC1_IN)
    p["fc2_w"] = u(ks[10], (32, 64), 64);          p["fc2_b"] = u(ks[11], (32,), 64)
    p["fc3_w"] = u(ks[12], (32, 32), 32);          p["fc3_b"] = u(ks[13], (32,), 32)
    p["fc4_w"] = u(ks[14], (16, 32), 32);          p["fc4_b"] = u(ks[15], (16,), 32)
    p["out_w"] = u(ks[16], (OUTPUT_LEN, 16), 16);  p["out_b"] = u(ks[17], (OUTPUT_LEN,), 16)
    # buffers (X_mean/X_std): non-trivial deterministic values
    p["X_mean"] = 0.1 * jax.random.normal(ks[18], (INPUT_LEN,), jnp.float32)
    p["X_std"] = 0.5 + jax.random.uniform(ks[19], (INPUT_LEN,), jnp.float32)
    return p


def reference_forward(x, p):
    """Plain-JAX replica of ModelN2n.forward (is_inference=False), for checking."""
    elu = lambda v: jnp.where(v > 0, v, jnp.exp(v) - 1.0)
    prec = lax.Precision.HIGHEST
    dn = ("NCH", "OIH", "NCH")
    xn = (x - p["X_mean"][None, :]) / p["X_std"][None, :]
    h = xn[:, None, :]
    a = elu(lax.conv_general_dilated(h, p["c11_w"], (4,), "VALID",
                                     dimension_numbers=dn, precision=prec)
            + p["c11_b"][None, :, None])
    a = elu(lax.conv_general_dilated(a, p["c12_w"], (4,), "VALID",
                                     dimension_numbers=dn, precision=prec)
            + p["c12_b"][None, :, None])
    x1 = a.reshape(a.shape[0], -1)
    b2 = elu(lax.conv_general_dilated(h, p["c21_w"], (1,), "VALID",
                                      rhs_dilation=(4,), dimension_numbers=dn,
                                      precision=prec)
             + p["c21_b"][None, :, None])
    b2 = elu(lax.conv_general_dilated(b2, p["c22_w"], (4,), "VALID",
                                      dimension_numbers=dn, precision=prec)
             + p["c22_b"][None, :, None])
    x2 = b2.reshape(b2.shape[0], -1)
    z = jnp.concatenate([x1, x2, xn], axis=1)
    dot = lambda a_, b_: jnp.dot(a_, b_, precision=prec)
    z = elu(dot(z, p["fc1_w"].T) + p["fc1_b"])
    z = elu(dot(z, p["fc2_w"].T) + p["fc2_b"])
    z = elu(dot(z, p["fc3_w"].T) + p["fc3_b"])
    z = elu(dot(z, p["fc4_w"].T) + p["fc4_b"])
    return elu(dot(z, p["out_w"].T) + p["out_b"])


if __name__ == "__main__":
    key = jax.random.PRNGKey(0)
    pk, xk = jax.random.split(key)
    params = init_params(pk)

    fwd = jax.jit(model_n2n_forward)

    # small batch (TB=16, grid=2, heavy padding path)
    B = 4
    x = jax.random.normal(xk, (B, INPUT_LEN), jnp.float32)
    y = jax.block_until_ready(fwd(x, params))
    y_ref = jax.block_until_ready(reference_forward(x, params))
    assert y.shape == (B, OUTPUT_LEN)
    np.testing.assert_allclose(np.asarray(y), np.asarray(y_ref), rtol=5e-2, atol=3e-2)

    # realistic tiled path: B=300 -> TB=160, grid=2, minimal batch padding
    B2 = 300
    x2 = jax.random.normal(jax.random.PRNGKey(1), (B2, INPUT_LEN), jnp.float32)
    y2 = jax.block_until_ready(fwd(x2, params))
    y2_ref = jax.block_until_ready(reference_forward(x2, params))
    np.testing.assert_allclose(np.asarray(y2), np.asarray(y2_ref), rtol=5e-2, atol=3e-2)

    print("KERNEL_OK")
</pallas_src>

<mosaic_0001>
module attributes {stable_mosaic.version = 11 : i64} {
  func.func @model_kernel(%arg0: i32, %arg1: memref<16x32xf32, #tpu.memory_space<vmem>>, %arg2: memref<32x768xbf16, #tpu.memory_space<vmem>>, %arg3: memref<1x768xf32, #tpu.memory_space<vmem>>, %arg4: memref<768x128xbf16, #tpu.memory_space<vmem>>, %arg5: memref<1x128xf32, #tpu.memory_space<vmem>>, %arg6: memref<128x128xbf16, #tpu.memory_space<vmem>>, %arg7: memref<32x128xbf16, #tpu.memory_space<vmem>>, %arg8: memref<1x128xf32, #tpu.memory_space<vmem>>, %arg9: memref<4x128x128xbf16, #tpu.memory_space<vmem>>, %arg10: memref<4x1x128xf32, #tpu.memory_space<vmem>>, %arg11: memref<16x128xbf16, #tpu.memory_space<vmem>>) attributes {dimension_semantics = [#tpu.dimension_semantics<parallel>], iteration_bounds = array<i64: 2>, scalar_prefetch = 0 : i64, scratch_operands = 0 : i64, tpu.core_type = #tpu.core_type<tc>, window_params = [{transform_indices = @transform_0, window_bounds = array<i64: 16, 32>}, {pipeline_mode = #tpu.pipeline_mode<synchronous>, transform_indices = @transform_1, window_bounds = array<i64: 32, 768>}, {pipeline_mode = #tpu.pipeline_mode<synchronous>, transform_indices = @transform_2, window_bounds = array<i64: 1, 768>}, {pipeline_mode = #tpu.pipeline_mode<synchronous>, transform_indices = @transform_3, window_bounds = array<i64: 768, 128>}, {pipeline_mode = #tpu.pipeline_mode<synchronous>, transform_indices = @transform_4, window_bounds = array<i64: 1, 128>}, {pipeline_mode = #tpu.pipeline_mode<synchronous>, transform_indices = @transform_5, window_bounds = array<i64: 128, 128>}, {pipeline_mode = #tpu.pipeline_mode<synchronous>, transform_indices = @transform_6, window_bounds = array<i64: 32, 128>}, {pipeline_mode = #tpu.pipeline_mode<synchronous>, transform_indices = @transform_7, window_bounds = array<i64: 1, 128>}, {pipeline_mode = #tpu.pipeline_mode<synchronous>, transform_indices = @transform_8, window_bounds = array<i64: 4, 128, 128>}, {pipeline_mode = #tpu.pipeline_mode<synchronous>, transform_indices = @transform_9, window_bounds = array<i64: 4, 1, 128>}, {transform_indices = @transform_10, window_bounds = array<i64: 16, 128>}]} {
    %c0 = arith.constant 0 : index
    %c0_0 = arith.constant 0 : index
    %0 = vector.load %arg1[%c0, %c0_0] : memref<16x32xf32, #tpu.memory_space<vmem>>, vector<16x32xf32>
    %1 = arith.truncf %0 : vector<16x32xf32> to vector<16x32xbf16>
    %c0_1 = arith.constant 0 : index
    %c0_2 = arith.constant 0 : index
    %2 = vector.load %arg2[%c0_1, %c0_2] : memref<32x768xbf16, #tpu.memory_space<vmem>>, vector<32x768xbf16>
    %cst = arith.constant dense<0.000000e+00> : vector<16x768xf32>
    %3 = tpu.matmul %1, %2, %cst {dimension_numbers = #tpu.dot_dimension_numbers<[1], [0], [0], [1], [0, 0, 1, 1], [], []>} : vector<16x32xbf16>, vector<32x768xbf16>, vector<16x768xf32> -> vector<16x768xf32>
    %c0_3 = arith.constant 0 : index
    %c0_4 = arith.constant 0 : index
    %4 = vector.load %arg3[%c0_3, %c0_4] : memref<1x768xf32, #tpu.memory_space<vmem>>, vector<1x768xf32>
    %5 = vector.broadcast %4 : vector<1x768xf32> to vector<16x768xf32>
    %6 = arith.addf %3, %5 : vector<16x768xf32>
    %cst_5 = arith.constant 0.000000e+00 : f32
    %7 = vector.broadcast %cst_5 : f32 to vector<16x768xf32>
    %8 = arith.cmpf ogt, %6, %7 : vector<16x768xf32>
    %9 = math.exp %6 : vector<16x768xf32>
    %cst_6 = arith.constant 1.000000e+00 : f32
    %10 = vector.broadcast %cst_6 : f32 to vector<16x768xf32>
    %11 = arith.subf %9, %10 : vector<16x768xf32>
    %12 = arith.select %8, %6, %11 : vector<16x768xi1>, vector<16x768xf32>
    %13 = arith.truncf %12 : vector<16x768xf32> to vector<16x768xbf16>
    %c0_7 = arith.constant 0 : index
    %c0_8 = arith.constant 0 : index
    %14 = vector.load %arg4[%c0_7, %c0_8] : memref<768x128xbf16, #tpu.memory_space<vmem>>, vector<768x128xbf16>
    %cst_9 = arith.constant dense<0.000000e+00> : vector<16x128xf32>
    %15 = tpu.matmul %13, %14, %cst_9 {dimension_numbers = #tpu.dot_dimension_numbers<[1], [0], [0], [1], [0, 0, 1, 1], [], []>} : vector<16x768xbf16>, vector<768x128xbf16>, vector<16x128xf32> -> vector<16x128xf32>
    %c0_10 = arith.constant 0 : index
    %c0_11 = arith.constant 0 : index
    %16 = vector.load %arg5[%c0_10, %c0_11] : memref<1x128xf32, #tpu.memory_space<vmem>>, vector<1x128xf32>
    %17 = vector.broadcast %16 : vector<1x128xf32> to vector<16x128xf32>
    %18 = arith.addf %15, %17 : vector<16x128xf32>
    %cst_12 = arith.constant 0.000000e+00 : f32
    %19 = vector.broadcast %cst_12 : f32 to vector<16x128xf32>
    %20 = arith.cmpf ogt, %18, %19 : vector<16x128xf32>
    %21 = math.exp %18 : vector<16x128xf32>
    %cst_13 = arith.constant 1.000000e+00 : f32
    %22 = vector.broadcast %cst_13 : f32 to vector<16x128xf32>
    %23 = arith.subf %21, %22 : vector<16x128xf32>
    %24 = arith.select %20, %18, %23 : vector<16x128xi1>, vector<16x128xf32>
    %25 = arith.truncf %24 : vector<16x128xf32> to vector<16x128xbf16>
    %c0_14 = arith.constant 0 : index
    %c0_15 = arith.constant 0 : index
    %26 = vector.load %arg6[%c0_14, %c0_15] : memref<128x128xbf16, #tpu.memory_space<vmem>>, vector<128x128xbf16>
    %cst_16 = arith.constant dense<0.000000e+00> : vector<16x128xf32>
    %27 = tpu.matmul %25, %26, %cst_16 {dimension_numbers = #tpu.dot_dimension_numbers<[1], [0], [0], [1], [0, 0, 1, 1], [], []>} : vector<16x128xbf16>, vector<128x128xbf16>, vector<16x128xf32> -> vector<16x128xf32>
    %c0_17 = arith.constant 0 : index
    %c0_18 = arith.constant 0 : index
    %28 = vector.load %arg7[%c0_17, %c0_18] : memref<32x128xbf16, #tpu.memory_space<vmem>>, vector<32x128xbf16>
    %cst_19 = arith.constant dense<0.000000e+00> : vector<16x128xf32>
    %29 = tpu.matmul %1, %28, %cst_19 {dimension_numbers = #tpu.dot_dimension_numbers<[1], [0], [0], [1], [0, 0, 1, 1], [], []>} : vector<16x32xbf16>, vector<32x128xbf16>, vector<16x128xf32> -> vector<16x128xf32>
    %30 = arith.addf %27, %29 : vector<16x128xf32>
    %c0_20 = arith.constant 0 : index
    %c0_21 = arith.constant 0 : index
    %31 = vector.load %arg8[%c0_20, %c0_21] : memref<1x128xf32, #tpu.memory_space<vmem>>, vector<1x128xf32>
    %32 = vector.broadcast %31 : vector<1x128xf32> to vector<16x128xf32>
    %33 = arith.addf %30, %32 : vector<16x128xf32>
    %cst_22 = arith.constant 0.000000e+00 : f32
    %34 = vector.broadcast %cst_22 : f32 to vector<16x128xf32>
    %35 = arith.cmpf ogt, %33, %34 : vector<16x128xf32>
    %36 = math.exp %33 : vector<16x128xf32>
    %cst_23 = arith.constant 1.000000e+00 : f32
    %37 = vector.broadcast %cst_23 : f32 to vector<16x128xf32>
    %38 = arith.subf %36, %37 : vector<16x128xf32>
    %39 = arith.select %35, %33, %38 : vector<16x128xi1>, vector<16x128xf32>
    %40 = arith.truncf %39 : vector<16x128xf32> to vector<16x128xbf16>
    %c0_24 = arith.constant 0 : index
    %c0_25 = arith.constant 0 : index
    %c0_26 = arith.constant 0 : index
    %41 = vector.load %arg9[%c0_24, %c0_25, %c0_26] : memref<4x128x128xbf16, #tpu.memory_space<vmem>>, vector<1x128x128xbf16>
    %42 = vector.shape_cast %41 : vector<1x128x128xbf16> to vector<128x128xbf16>
    %cst_27 = arith.constant dense<0.000000e+00> : vector<16x128xf32>
    %43 = tpu.matmul %40, %42, %cst_27 {dimension_numbers = #tpu.dot_dimension_numbers<[1], [0], [0], [1], [0, 0, 1, 1], [], []>} : vector<16x128xbf16>, vector<128x128xbf16>, vector<16x128xf32> -> vector<16x128xf32>
    %c0_28 = arith.constant 0 : index
    %c0_29 = arith.constant 0 : index
    %c0_30 = arith.constant 0 : index
    %44 = vector.load %arg10[%c0_28, %c0_29, %c0_30] : memref<4x1x128xf32, #tpu.memory_space<vmem>>, vector<1x1x128xf32>
    %45 = vector.shape_cast %44 : vector<1x1x128xf32> to vector<1x128xf32>
    %46 = vector.broadcast %45 : vector<1x128xf32> to vector<16x128xf32>
    %47 = arith.addf %43, %46 : vector<16x128xf32>
    %cst_31 = arith.constant 0.000000e+00 : f32
    %48 = vector.broadcast %cst_31 : f32 to vector<16x128xf32>
    %49 = arith.cmpf ogt, %47, %48 : vector<16x128xf32>
    %50 = math.exp %47 : vector<16x128xf32>
    %cst_32 = arith.constant 1.000000e+00 : f32
    %51 = vector.broadcast %cst_32 : f32 to vector<16x128xf32>
    %52 = arith.subf %50, %51 : vector<16x128xf32>
    %53 = arith.select %49, %47, %52 : vector<16x128xi1>, vector<16x128xf32>
    %54 = arith.truncf %53 : vector<16x128xf32> to vector<16x128xbf16>
    %c1 = arith.constant 1 : index
    %c0_33 = arith.constant 0 : index
    %c0_34 = arith.constant 0 : index
    %55 = vector.load %arg9[%c1, %c0_33, %c0_34] : memref<4x128x128xbf16, #tpu.memory_space<vmem>>, vector<1x128x128xbf16>
    %56 = vector.shape_cast %55 : vector<1x128x128xbf16> to vector<128x128xbf16>
    %cst_35 = arith.constant dense<0.000000e+00> : vector<16x128xf32>
    %57 = tpu.matmul %54, %56, %cst_35 {dimension_numbers = #tpu.dot_dimension_numbers<[1], [0], [0], [1], [0, 0, 1, 1], [], []>} : vector<16x128xbf16>, vector<128x128xbf16>, vector<16x128xf32> -> vector<16x128xf32>
    %c1_36 = arith.constant 1 : index
    %c0_37 = arith.constant 0 : index
    %c0_38 = arith.constant 0 : index
    %58 = vector.load %arg10[%c1_36, %c0_37, %c0_38] : memref<4x1x128xf32, #tpu.memory_space<vmem>>, vector<1x1x128xf32>
    %59 = vector.shape_cast %58 : vector<1x1x128xf32> to vector<1x128xf32>
    %60 = vector.broadcast %59 : vector<1x128xf32> to vector<16x128xf32>
    %61 = arith.addf %57, %60 : vector<16x128xf32>
    %cst_39 = arith.constant 0.000000e+00 : f32
    %62 = vector.broadcast %cst_39 : f32 to vector<16x128xf32>
    %63 = arith.cmpf ogt, %61, %62 : vector<16x128xf32>
    %64 = math.exp %61 : vector<16x128xf32>
    %cst_40 = arith.constant 1.000000e+00 : f32
    %65 = vector.broadcast %cst_40 : f32 to vector<16x128xf32>
    %66 = arith.subf %64, %65 : vector<16x128xf32>
    %67 = arith.select %63, %61, %66 : vector<16x128xi1>, vector<16x128xf32>
    %68 = arith.truncf %67 : vector<16x128xf32> to vector<16x128xbf16>
    %c2 = arith.constant 2 : index
    %c0_41 = arith.constant 0 : index
    %c0_42 = arith.constant 0 : index
    %69 = vector.load %arg9[%c2, %c0_41, %c0_42] : memref<4x128x128xbf16, #tpu.memory_space<vmem>>, vector<1x128x128xbf16>
    %70 = vector.shape_cast %69 : vector<1x128x128xbf16> to vector<128x128xbf16>
    %cst_43 = arith.constant dense<0.000000e+00> : vector<16x128xf32>
    %71 = tpu.matmul %68, %70, %cst_43 {dimension_numbers = #tpu.dot_dimension_numbers<[1], [0], [0], [1], [0, 0, 1, 1], [], []>} : vector<16x128xbf16>, vector<128x128xbf16>, vector<16x128xf32> -> vector<16x128xf32>
    %c2_44 = arith.constant 2 : index
    %c0_45 = arith.constant 0 : index
    %c0_46 = arith.constant 0 : index
    %72 = vector.load %arg10[%c2_44, %c0_45, %c0_46] : memref<4x1x128xf32, #tpu.memory_space<vmem>>, vector<1x1x128xf32>
    %73 = vector.shape_cast %72 : vector<1x1x128xf32> to vector<1x128xf32>
    %74 = vector.broadcast %73 : vector<1x128xf32> to vector<16x128xf32>
    %75 = arith.addf %71, %74 : vector<16x128xf32>
    %cst_47 = arith.constant 0.000000e+00 : f32
    %76 = vector.broadcast %cst_47 : f32 to vector<16x128xf32>
    %77 = arith.cmpf ogt, %75, %76 : vector<16x128xf32>
    %78 = math.exp %75 : vector<16x128xf32>
    %cst_48 = arith.constant 1.000000e+00 : f32
    %79 = vector.broadcast %cst_48 : f32 to vector<16x128xf32>
    %80 = arith.subf %78, %79 : vector<16x128xf32>
    %81 = arith.select %77, %75, %80 : vector<16x128xi1>, vector<16x128xf32>
    %82 = arith.truncf %81 : vector<16x128xf32> to vector<16x128xbf16>
    %c3 = arith.constant 3 : index
    %c0_49 = arith.constant 0 : index
    %c0_50 = arith.constant 0 : index
    %83 = vector.load %arg9[%c3, %c0_49, %c0_50] : memref<4x128x128xbf16, #tpu.memory_space<vmem>>, vector<1x128x128xbf16>
    %84 = vector.shape_cast %83 : vector<1x128x128xbf16> to vector<128x128xbf16>
    %cst_51 = arith.constant dense<0.000000e+00> : vector<16x128xf32>
    %85 = tpu.matmul %82, %84, %cst_51 {dimension_numbers = #tpu.dot_dimension_numbers<[1], [0], [0], [1], [0, 0, 1, 1], [], []>} : vector<16x128xbf16>, vector<128x128xbf16>, vector<16x128xf32> -> vector<16x128xf32>
    %c3_52 = arith.constant 3 : index
    %c0_53 = arith.constant 0 : index
    %c0_54 = arith.constant 0 : index
    %86 = vector.load %arg10[%c3_52, %c0_53, %c0_54] : memref<4x1x128xf32, #tpu.memory_space<vmem>>, vector<1x1x128xf32>
    %87 = vector.shape_cast %86 : vector<1x1x128xf32> to vector<1x128xf32>
    %88 = vector.broadcast %87 : vector<1x128xf32> to vector<16x128xf32>
    %89 = arith.addf %85, %88 : vector<16x128xf32>
    %cst_55 = arith.constant 0.000000e+00 : f32
    %90 = vector.broadcast %cst_55 : f32 to vector<16x128xf32>
    %91 = arith.cmpf ogt, %89, %90 : vector<16x128xf32>
    %92 = math.exp %89 : vector<16x128xf32>
    %cst_56 = arith.constant 1.000000e+00 : f32
    %93 = vector.broadcast %cst_56 : f32 to vector<16x128xf32>
    %94 = arith.subf %92, %93 : vector<16x128xf32>
    %95 = arith.select %91, %89, %94 : vector<16x128xi1>, vector<16x128xf32>
    %96 = arith.truncf %95 : vector<16x128xf32> to vector<16x128xbf16>
    %c0_57 = arith.constant 0 : index
    %c0_58 = arith.constant 0 : index
    %97 = vector.load %arg11[%c0_57, %c0_58] : memref<16x128xbf16, #tpu.memory_space<vmem>>, vector<16x128xbf16>
    tpu.vector_store %arg11[%c0_57, %c0_58], %96 {strides = array<i32>} : memref<16x128xbf16, #tpu.memory_space<vmem>>, vector<16x128xbf16>,
    return
  }
  func.func @transform_0(%arg0: i32) -> (i32, i32) {
    %c0_i32 = arith.constant 0 : i32
    %c0_i32_0 = arith.constant 0 : i32
    return %arg0, %c0_i32 : i32, i32
  }
  func.func @transform_1(%arg0: i32) -> (i32, i32) {
    %c0_i32 = arith.constant 0 : i32
    %c0_i32_0 = arith.constant 0 : i32
    %c0_i32_1 = arith.constant 0 : i32
    return %c0_i32, %c0_i32_0 : i32, i32
  }
  func.func @transform_2(%arg0: i32) -> (i32, i32) {
    %c0_i32 = arith.constant 0 : i32
    %c0_i32_0 = arith.constant 0 : i32
    %c0_i32_1 = arith.constant 0 : i32
    return %c0_i32, %c0_i32_0 : i32, i32
  }
  func.func @transform_3(%arg0: i32) -> (i32, i32) {
    %c0_i32 = arith.constant 0 : i32
    %c0_i32_0 = arith.constant 0 : i32
    %c0_i32_1 = arith.constant 0 : i32
    return %c0_i32, %c0_i32_0 : i32, i32
  }
  func.func @transform_4(%arg0: i32) -> (i32, i32) {
    %c0_i32 = arith.constant 0 : i32
    %c0_i32_0 = arith.constant 0 : i32
    %c0_i32_1 = arith.constant 0 : i32
    return %c0_i32, %c0_i32_0 : i32, i32
  }
  func.func @transform_5(%arg0: i32) -> (i32, i32) {
    %c0_i32 = arith.constant 0 : i32
    %c0_i32_0 = arith.constant 0 : i32
    %c0_i32_1 = arith.constant 0 : i32
    return %c0_i32, %c0_i32_0 : i32, i32
  }
  func.func @transform_6(%arg0: i32) -> (i32, i32) {
    %c0_i32 = arith.constant 0 : i32
    %c0_i32_0 = arith.constant 0 : i32
    %c0_i32_1 = arith.constant 0 : i32
    return %c0_i32, %c0_i32_0 : i32, i32
  }
  func.func @transform_7(%arg0: i32) -> (i32, i32) {
    %c0_i32 = arith.constant 0 : i32
    %c0_i32_0 = arith.constant 0 : i32
    %c0_i32_1 = arith.constant 0 : i32
    return %c0_i32, %c0_i32_0 : i32, i32
  }
  func.func @transform_8(%arg0: i32) -> (i32, i32, i32) {
    %c0_i32 = arith.constant 0 : i32
    %c0_i32_0 = arith.constant 0 : i32
    %c0_i32_1 = arith.constant 0 : i32
    %c0_i32_2 = arith.constant 0 : i32
    return %c0_i32, %c0_i32_0, %c0_i32_1 : i32, i32, i32
  }
  func.func @transform_9(%arg0: i32) -> (i32, i32, i32) {
    %c0_i32 = arith.constant 0 : i32
    %c0_i32_0 = arith.constant 0 : i32
    %c0_i32_1 = arith.constant 0 : i32
    %c0_i32_2 = arith.constant 0 : i32
    return %c0_i32, %c0_i32_0, %c0_i32_1 : i32, i32, i32
  }
  func.func @transform_10(%arg0: i32) -> (i32, i32) {
    %c0_i32 = arith.constant 0 : i32
    %c0_i32_0 = arith.constant 0 : i32
    return %arg0, %c0_i32 : i32, i32
  }
}

</mosaic_0001>

<llo_original>
// kernel: div.9
$region0: #{div.9}
  #allocation0 [shape = 's32[1]{0}', space=sflag, size = 0x4, scoped, tag = 'scoped memory for div.9']
  %s0 = inlined_call_operand.vmem [shape: f32[32], index: 0, kind: input, shape index: {}]
  %s1 = inlined_call_operand.vmem [shape: f32[32], index: 1, kind: input, shape index: {}]
  %s2 = inlined_call_operand.vmem [shape: f32[32], index: 2, kind: output, shape index: {}]
  %v3 = vld [vmem:[%s0] sm:$0x1]
  %v4 = vld [vmem:[%s1] sm:$0x1]
  %5 = xla_tuple %v3, %v4
  %6 = xla_tuple %5
  %v7 = vrcp.pop %v4
  %v8 = vmul.f32 %v3, %v7
  %9 = xla_tuple %v8
  %10 = vst [vmem:[%s2] sm:$0x1] %v8

// kernel: tile.23
$region0: #{tile.23}
  #allocation0 [shape = 's32[1]{0}', space=sflag, size = 0x4, scoped, tag = 'scoped memory for tile.23']
  %s0 = inlined_call_operand.vmem [shape: f32[32], index: 0, kind: input, shape index: {}]
  %s1 = inlined_call_operand.vmem [shape: f32[16,32], index: 1, kind: output, shape index: {}]
  // Predicated region
  $region2: #{tile.23} parent=0 // pred_check
    _
  $region3: #{tile.23} parent=0 // pred_check_branch
    %3 = sbr.rel (0) target = $region5
  $region4: #{tile.23} parent=0 // pred_region
    _
  $region5: #{tile.23} parent=0 // pred_fallthru
    _
  %v4 = vld [vmem:[%s0] ss:$0 sm:$0xff]
  %5 = vst [vmem:[%s1] sm:$0xff] %v4
  %s6 = scalar_lea.vmem %s1, 8
  %7 = vst [vmem:[%s6] sm:$0xff] %v4

// kernel: tile.18
$region0: #{tile.18}
  #allocation0 [shape = 's32[1]{0}', space=sflag, size = 0x4, scoped, tag = 'scoped memory for tile.18']
  %s0 = inlined_call_operand.vmem [shape: f32[32], index: 0, kind: input, shape index: {}]
  %s1 = inlined_call_operand.vmem [shape: f32[8,32], index: 1, kind: output, shape index: {}]
  // Predicated region
  $region2: #{tile.18} parent=0 // pred_check
    _
  $region3: #{tile.18} parent=0 // pred_check_branch
    %3 = sbr.rel (0) target = $region5
  $region4: #{tile.18} parent=0 // pred_region
    _
  $region5: #{tile.18} parent=0 // pred_fallthru
    _
  %v4 = vld [vmem:[%s0] ss:$0 sm:$0xff]
  %5 = vst [vmem:[%s1] sm:$0xff] %v4

// kernel: mul.4
$region0: #{mul.4}
  %s0 = inlined_call_operand.vmem [shape: f32[4,32,24], index: 0, kind: input, shape index: {}]
  %s1 = inlined_call_operand.vmem [shape: f32[128,24], index: 1, kind: output, shape index: {}]
  $region1: #{mul.4} parent=0
    #allocation0 [shape = 'u8[98304]{0}', space=vmem, size = 0x18000, scoped, tag = 'scoped mem for input reshape']
    %s3 = sshllo.u32 0, 4
    %s4 = smul.addr 4, 23
    %s5 = scalar_lea.vmem %s0, %s4
    %v6 = vld [vmem:[%s5] sm:%s3]
    %s7 = scalar_lea.vmem [#allocation0], 184
    %8 = vst [vmem:[%s7] sm:%s3] %v6
    %s9 = smul.addr 4, 22
    %s10 = scalar_lea.vmem %s0, %s9
    %v11 = vld [vmem:[%s10] sm:%s3]
    %s12 = scalar_lea.vmem [#allocation0], 176
    %13 = vst [vmem:[%s12] sm:%s3] %v11
    %s14 = smul.addr 4, 21
    %s15 = scalar_lea.vmem %s0, %s14
    %v16 = vld [vmem:[%s15] sm:%s3]
    %s17 = scalar_lea.vmem [#allocation0], 168
    %18 = vst [vmem:[%s17] sm:%s3] %v16
    %s19 = smul.addr 4, 20
    %s20 = scalar_lea.vmem %s0, %s19
    %v21 = vld [vmem:[%s20] sm:%s3]
    %s22 = scalar_lea.vmem [#allocation0], 160
    %23 = vst [vmem:[%s22] sm:%s3] %v21
    %s24 = smul.addr 4, 19
    %s25 = scalar_lea.vmem %s0, %s24
    %v26 = vld [vmem:[%s25] sm:%s3]
    %s27 = scalar_lea.vmem [#allocation0], 152
    %28 = vst [vmem:[%s27] sm:%s3] %v26
    %s29 = smul.addr 4, 18
    %s30 = scalar_lea.vmem %s0, %s29
    %v31 = vld [vmem:[%s30] sm:%s3]
    %s32 = scalar_lea.vmem [#allocation0], 144
    %33 = vst [vmem:[%s32] sm:%s3] %v31
    %s34 = smul.addr 4, 17
    %s35 = scalar_lea.vmem %s0, %s34
    %v36 = vld [vmem:[%s35] sm:%s3]
    %s37 = scalar_lea.vmem [#allocation0], 136
    %38 = vst [vmem:[%s37] sm:%s3] %v36
    %s39 = smul.addr 4, 16
    %s40 = scalar_lea.vmem %s0, %s39
    %v41 = vld [vmem:[%s40] sm:%s3]
    %s42 = scalar_lea.vmem [#allocation0], 128
    %43 = vst [vmem:[%s42] sm:%s3] %v41
    %s44 = smul.addr 4, 15
    %s45 = scalar_lea.vmem %s0, %s44
    %v46 = vld [vmem:[%s45] sm:%s3]
    %s47 = scalar_lea.vmem [#allocation0], 120
    %48 = vst [vmem:[%s47] sm:%s3] %v46
    %s49 = smul.addr 4, 14
    %s50 = scalar_lea.vmem %s0, %s49
    %v51 = vld [vmem:[%s50] sm:%s3]
    %s52 = scalar_lea.vmem [#allocation0], 112
    %53 = vst [vmem:[%s52] sm:%s3] %v51
    %s54 = smul.addr 4, 13
    %s55 = scalar_lea.vmem %s0, %s54
    %v56 = vld [vmem:[%s55] sm:%s3]
    %s57 = scalar_lea.vmem [#allocation0], 104
    %58 = vst [vmem:[%s57] sm:%s3] %v56
    %s59 = smul.addr 4, 12
    %s60 = scalar_lea.vmem %s0, %s59
    %v61 = vld [vmem:[%s60] sm:%s3]
    %s62 = scalar_lea.vmem [#allocation0], 96
    %63 = vst [vmem:[%s62] sm:%s3] %v61
    %s64 = smul.addr 4, 11
    %s65 = scalar_lea.vmem %s0, %s64
    %v66 = vld [vmem:[%s65] sm:%s3]
    %s67 = scalar_lea.vmem [#allocation0], 88
    %68 = vst [vmem:[%s67] sm:%s3] %v66
    %s69 = smul.addr 4, 10
    %s70 = scalar_lea.vmem %s0, %s69
    %v71 = vld [vmem:[%s70] sm:%s3]
    %s72 = scalar_lea.vmem [#allocation0], 80
    %73 = vst [vmem:[%s72] sm:%s3] %v71
    %s74 = smul.addr 4, 9
    %s75 = scalar_lea.vmem %s0, %s74
    %v76 = vld [vmem:[%s75] sm:%s3]
    %s77 = scalar_lea.vmem [#allocation0], 72
    %78 = vst [vmem:[%s77] sm:%s3] %v76
    %s79 = smul.addr 4, 8
    %s80 = scalar_lea.vmem %s0, %s79
    %v81 = vld [vmem:[%s80] sm:%s3]
    %s82 = scalar_lea.vmem [#allocation0], 64
    %83 = vst [vmem:[%s82] sm:%s3] %v81
    %s84 = smul.addr 4, 7
    %s85 = scalar_lea.vmem %s0, %s84
    %v86 = vld [vmem:[%s85] sm:%s3]
    %s87 = scalar_lea.vmem [#allocation0], 56
    %88 = vst [vmem:[%s87] sm:%s3] %v86
    %s89 = smul.addr 4, 6
    %s90 = scalar_lea.vmem %s0, %s89
    %v91 = vld [vmem:[%s90] sm:%s3]
    %s92 = scalar_lea.vmem [#allocation0], 48
    %93 = vst [vmem:[%s92] sm:%s3] %v91
    %s94 = smul.addr 4, 5
    %s95 = scalar_lea.vmem %s0, %s94
    %v96 = vld [vmem:[%s95] sm:%s3]
    %s97 = scalar_lea.vmem [#allocation0], 40
    %98 = vst [vmem:[%s97] sm:%s3] %v96
    %s99 = smul.addr 4, 4
    %s100 = scalar_lea.vmem %s0, %s99
    %v101 = vld [vmem:[%s100] sm:%s3]
    %s102 = scalar_lea.vmem [#allocation0], 32
    %103 = vst [vmem:[%s102] sm:%s3] %v101
    %s104 = smul.addr 4, 3
    %s105 = scalar_lea.vmem %s0, %s104
    %v106 = vld [vmem:[%s105] sm:%s3]
    %s107 = scalar_lea.vmem [#allocation0], 24
    %108 = vst [vmem:[%s107] sm:%s3] %v106
    %s109 = smul.addr 4, 2
    %s110 = scalar_lea.vmem %s0, %s109
    %v111 = vld [vmem:[%s110] sm:%s3]
    %s112 = scalar_lea.vmem [#allocation0], 16
    %113 = vst [vmem:[%s112] sm:%s3] %v111
    %s114 = scalar_lea.vmem %s0, 4
    %v115 = vld [vmem:[%s114] sm:%s3]
    %s116 = scalar_lea.vmem [#allocation0], 8
    %117 = vst [vmem:[%s116] sm:%s3] %v115
    %v118 = vld [vmem:[%s0] sm:%s3]
    %119 = vst [vmem:[#allocation0] sm:%s3] %v118
    %v120 = vld [vmem:[#allocation0] ss:$8 sm:$0xf]
    %v121 = vld [vmem:[#allocation0] ss:$8 sm:$0xf0]
    %vm122 = vcmask 1047556
    %v123 = vsel %vm122, %v121, %v120
    %vm124 = vcmask 261120
    %125 = vst.msk [vmem:[%s1] sm:$0xff] %vm124, %v123
    %s126 = scalar_lea.vmem [#allocation0], 64
    %v127 = vld [vmem:[%s126] ss:$8 sm:$0xf]
    %s128 = scalar_lea.vmem [#allocation0], 64
    %v129 = vld [vmem:[%s128] ss:$8 sm:$0xf0]
    %vm130 = vcmask 1047556
    %v131 = vsel %vm130, %v129, %v127
    %vm132 = vcmask 261120
    %s133 = scalar_lea.vmem %s1, 8
    %134 = vst.msk [vmem:[%s133] sm:$0xff] %vm132, %v131
    %s135 = scalar_lea.vmem [#allocation0], 128
    %v136 = vld [vmem:[%s135] ss:$8 sm:$0xf]
    %s137 = scalar_lea.vmem [#allocation0], 128
    %v138 = vld [vmem:[%s137] ss:$8 sm:$0xf0]
    %vm139 = vcmask 1047556
    %v140 = vsel %vm139, %v138, %v136
    %vm141 = vcmask 261120
    %s142 = scalar_lea.vmem %s1, 16
    %143 = vst.msk [vmem:[%s142] sm:$0xff] %vm141, %v140
    %s144 = scalar_lea.vmem [#allocation0], 3
    %v145 = vld [vmem:[%s144] ss:$8 sm:$0xf]
    %s146 = scalar_lea.vmem [#allocation0], 3
    %v147 = vld [vmem:[%s146] ss:$8 sm:$0xf0]
    %vm148 = vcmask 1047556
    %v149 = vsel %vm148, %v147, %v145
    %150 = vrot.lane.b32.xlu0 %v149, 96
    %v151 = vpop.permute.xlu0 %150
    %vm152 = vcmask 1048320
    %153 = vst.msk [vmem:[%s1] sm:$0xff] %vm152, %v151
    %s154 = scalar_lea.vmem [#allocation0], 67
    %v155 = vld [vmem:[%s154] ss:$8 sm:$0xf]
    %s156 = scalar_lea.vmem [#allocation0], 67
    %v157 = vld [vmem:[%s156] ss:$8 sm:$0xf0]
    %vm158 = vcmask 1047556
    %v159 = vsel %vm158, %v157, %v155
    %160 = vrot.lane.b32.xlu0 %v159, 96
    %v161 = vpop.permute.xlu0 %160
    %vm162 = vcmask 1048320
    %s163 = scalar_lea.vmem %s1, 8
    %164 = vst.msk [vmem:[%s163] sm:$0xff] %vm162, %v161
    %s165 = scalar_lea.vmem [#allocation0], 131
    %v166 = vld [vmem:[%s165] ss:$8 sm:$0xf]
    %s167 = scalar_lea.vmem [#allocation0], 131
    %v168 = vld [vmem:[%s167] ss:$8 sm:$0xf0]
    %vm169 = vcmask 1047556
    %v170 = vsel %vm169, %v168, %v166
    %171 = vrot.lane.b32.xlu0 %v170, 96
    %v172 = vpop.permute.xlu0 %171
    %vm173 = vcmask 1048320
    %s174 = scalar_lea.vmem %s1, 16
    %175 = vst.msk [vmem:[%s174] sm:$0xff] %vm173, %v172
    %s176 = scalar_lea.vmem [#allocation0], 2
    %v177 = vld [vmem:[%s176] ss:$8 sm:$0xf]
    %s178 = scalar_lea.vmem [#allocation0], 2
    %v179 = vld [vmem:[%s178] ss:$8 sm:$0xf0]
    %vm180 = vcmask 1047556
    %v181 = vsel %vm180, %v179, %v177
    %182 = vrot.lane.b32.xlu0 %v181, 64
    %v183 = vpop.permute.xlu0 %182
    %vm184 = vcmask 785920
    %185 = vst.msk [vmem:[%s1] sm:$0xff] %vm184, %v183
    %s186 = scalar_lea.vmem [#allocation0], 66
    %v187 = vld [vmem:[%s186] ss:$8 sm:$0xf]
    %s188 = scalar_lea.vmem [#allocation0], 66
    %v189 = vld [vmem:[%s188] ss:$8 sm:$0xf0]
    %vm190 = vcmask 1047556
    %v191 = vsel %vm190, %v189, %v187
    %192 = vrot.lane.b32.xlu0 %v191, 64
    %v193 = vpop.permute.xlu0 %192
    %vm194 = vcmask 785920
    %s195 = scalar_lea.vmem %s1, 8
    %196 = vst.msk [vmem:[%s195] sm:$0xff] %vm194, %v193
    %s197 = scalar_lea.vmem [#allocation0], 130
    %v198 = vld [vmem:[%s197] ss:$8 sm:$0xf]
    %s199 = scalar_lea.vmem [#allocation0], 130
    %v200 = vld [vmem:[%s199] ss:$8 sm:$0xf0]
    %vm201 = vcmask 1047556
    %v202 = vsel %vm201, %v200, %v198
    %203 = vrot.lane.b32.xlu0 %v202, 64
    %v204 = vpop.permute.xlu0 %203
    %vm205 = vcmask 785920
    %s206 = scalar_lea.vmem %s1, 16
    %207 = vst.msk [vmem:[%s206] sm:$0xff] %vm205, %v204
    %s208 = scalar_lea.vmem [#allocation0], 1
    %v209 = vld [vmem:[%s208] ss:$8 sm:$0xf]
    %s210 = scalar_lea.vmem [#allocation0], 1
    %v211 = vld [vmem:[%s210] ss:$8 sm:$0xf0]
    %vm212 = vcmask 1047556
    %v213 = vsel %vm212, %v211, %v209
    %214 = vrot.lane.b32.xlu0 %v213, 32
    %v215 = vpop.permute.xlu0 %214
    %vm216 = vcmask 523520
    %217 = vst.msk [vmem:[%s1] sm:$0xff] %vm216, %v215
    %s218 = scalar_lea.vmem [#allocation0], 65
    %v219 = vld [vmem:[%s218] ss:$8 sm:$0xf]
    %s220 = scalar_lea.vmem [#allocation0], 65
    %v221 = vld [vmem:[%s220] ss:$8 sm:$0xf0]
    %vm222 = vcmask 1047556
    %v223 = vsel %vm222, %v221, %v219
    %224 = vrot.lane.b32.xlu0 %v223, 32
    %v225 = vpop.permute.xlu0 %224
    %vm226 = vcmask 523520
    %s227 = scalar_lea.vmem %s1, 8
    %228 = vst.msk [vmem:[%s227] sm:$0xff] %vm226, %v225
    %s229 = scalar_lea.vmem [#allocation0], 129
    %v230 = vld [vmem:[%s229] ss:$8 sm:$0xf]
    %s231 = scalar_lea.vmem [#allocation0], 129
    %v232 = vld [vmem:[%s231] ss:$8 sm:$0xf0]
    %vm233 = vcmask 1047556
    %v234 = vsel %vm233, %v232, %v230
    %235 = vrot.lane.b32.xlu0 %v234, 32
    %v236 = vpop.permute.xlu0 %235
    %vm237 = vcmask 523520
    %s238 = scalar_lea.vmem %s1, 16
    %239 = vst.msk [vmem:[%s238] sm:$0xff] %vm237, %v236

// kernel: tile.28
$region0: #{tile.28}
  #allocation0 [shape = 's32[1]{0}', space=sflag, size = 0x4, scoped, tag = 'scoped memory for tile.28']
  %s0 = inlined_call_operand.vmem [shape: f32[24], index: 0, kind: input, shape index: {}]
  %s1 = inlined_call_operand.vmem [shape: f32[4,24], index: 1, kind: output, shape index: {}]
  // Predicated region
  $region2: #{tile.28} parent=0 // pred_check
    _
  $region3: #{tile.28} parent=0 // pred_check_branch
    %3 = sbr.rel (0) target = $region5
  $region4: #{tile.28} parent=0 // pred_region
    _
  $region5: #{tile.28} parent=0 // pred_fallthru
    _
  %v4 = vld [vmem:[%s0] ss:$0 sm:$0xff]
  %5 = vst [vmem:[%s1] sm:$0xf] %v4

// kernel: model_n2n_forward.1
$region0: #{model_n2n_forward.1}
  #allocation0 [shape = 'u32[]', space=smem, size = 0x4, offset = 0x4, fixed_abs, tag = 'smem constant byte address 0x4 - core index']
  #allocation1 [shape = 'u32[144,128]{1,0:T(1,128)}', space=vmem, size = 0x12000, scoped, tag = 'internal scratch']
  %s0 = inlined_call_operand.vmem [shape: f32[32,32], index: 0, kind: input, shape index: {}]
  %s1 = inlined_call_operand.vmem [shape: bf16[32,768], index: 1, kind: input, shape index: {}]
  %s2 = inlined_call_operand.vmem [shape: f32[1,768], index: 2, kind: input, shape index: {}]
  %s3 = inlined_call_operand.vmem [shape: bf16[768,128], index: 3, kind: input, shape index: {}]
  %s4 = inlined_call_operand.vmem [shape: f32[1,128], index: 4, kind: input, shape index: {}]
  %s5 = inlined_call_operand.vmem [shape: bf16[128,128], index: 5, kind: input, shape index: {}]
  %s6 = inlined_call_operand.vmem [shape: bf16[32,128], index: 6, kind: input, shape index: {}]
  %s7 = inlined_call_operand.vmem [shape: f32[1,128], index: 7, kind: input, shape index: {}]
  %s8 = inlined_call_operand.vmem [shape: bf16[4,128,128], index: 8, kind: input, shape index: {}]
  %s9 = inlined_call_operand.vmem [shape: f32[4,1,128], index: 9, kind: input, shape index: {}]
  %s10 = inlined_call_operand.vmem [shape: bf16[32,128], index: 10, kind: output, shape index: {}]
  %s11 = sld [smem:[#allocation0]]
  $region73: #{model_n2n_forward.1} parent=0
    _
  %s13 = ssub.s32 1, %s11
  %s14 = scalar_select 0, %s13, %s11
  loop: start=0, step=1, limit=4
  $region2: #{model_n2n_forward.1} parent=0 // loop_pre_header
    _
  $region3: #{model_n2n_forward.1} parent=0 // loop_header
    %s16 = sphi 0, %s20
    %p17 = scmp.ge.s32.totalorder %s16, 4
    %s26 = sphi 0, %s28
    %s29 = sphi 0, %s26
    %s30 = sphi 0, %s29
    %s46 = sphi 0, %s30
    %s50 = sphi 0, %s50
    %s52 = sphi 0, %s50
    %s53 = sphi 0, %s52
    %s67 = sphi 0, %s53
    %s71 = sphi 0, %s71
    %s73 = sphi 0, %s71
    %s74 = sphi 0, %s73
    %s88 = sphi 0, %s74
    %s92 = sphi 0, %s92
    %s94 = sphi 0, %s92
    %s95 = sphi 0, %s94
    %s109 = sphi 0, %s95
    %s113 = sphi 0, %s113
    %s115 = sphi 0, %s113
    %s116 = sphi 0, %s115
    %s130 = sphi 0, %s116
    %s134 = sphi 0, %s134
    %s136 = sphi 0, %s134
    %s137 = sphi 0, %s136
    %s151 = sphi 0, %s137
    %s155 = sphi 0, %s155
    %s157 = sphi 0, %s155
    %s158 = sphi 0, %s157
    %s172 = sphi 0, %s158
    %s176 = sphi 0, %s176
    %s178 = sphi 0, %s176
    %s179 = sphi 0, %s178
    %s193 = sphi 0, %s179
    %s197 = sphi 0, %s197
    %s199 = sphi 0, %s197
    %s200 = sphi 0, %s199
    %s214 = sphi 0, %s200
    %s218 = sphi 0, %s218
    %s220 = sphi 0, %s218
    %s221 = sphi 0, %s220
    %s235 = sphi 0, %s221
    %s241 = sphi 0, %s243
    %s244 = sphi 0, %s241
    %s245 = sphi 0, %s244
    %s261 = sphi 0, %s245
  $region4: #{model_n2n_forward.1} parent=0 // loop_header_branch
    %19 = sbr.rel (%p17) target = $region8
  $region5: #{model_n2n_forward.1} parent=0 // loop_body
    %s21 = ssub.s32 %s16, 1
    %s22 = ssub.s32 %s16, 2
    %s23 = sadd.s32 %s16, 1
    %s24 = ssub.s32 %s16, %s23
    %p25 = scmp.eq.s32.totalorder %s24, 0
    %s27 = sadd.s32 %s26, 1
    %s28 = scalar_select %p25, %s26, %s27
    %p31 = pneg %p25
    %p32 = scmp.eq.s32.totalorder %s16, 1
    %p33 = por %p31, %p32
    %p34 = scmp.ne.s32.totalorder %s26, %s29
    %p35 = scmp.eq.s32.totalorder %s16, 0
    %p36 = por %p34, %p35
    %p37 = scmp.ne.s32.totalorder %s26, %s29
    %p38 = scmp.eq.s32.totalorder %s21, 1
    %p39 = por %p37, %p38
    %p40 = scmp.ne.s32.totalorder %s29, %s30
    %p41 = scmp.eq.s32.totalorder %s21, 0
    %p42 = por %p40, %p41
    %p43 = scmp.ne.s32.totalorder %s29, %s30
    %p44 = scmp.eq.s32.totalorder %s22, 1
    %p45 = por %p43, %p44
    %p47 = scmp.ne.s32.totalorder %s30, %s46
    %p48 = scmp.eq.s32.totalorder %s22, 0
    %p49 = por %p47, %p48
    %s51 = sadd.s32 %s50, 1
    %p54 = scmp.eq.s32.totalorder %s16, 1
    %p55 = scmp.ne.s32.totalorder %s50, %s52
    %p56 = scmp.eq.s32.totalorder %s16, 0
    %p57 = por %p55, %p56
    %p58 = scmp.ne.s32.totalorder %s50, %s52
    %p59 = scmp.eq.s32.totalorder %s21, 1
    %p60 = por %p58, %p59
    %p61 = scmp.ne.s32.totalorder %s52, %s53
    %p62 = scmp.eq.s32.totalorder %s21, 0
    %p63 = por %p61, %p62
    %p64 = scmp.ne.s32.totalorder %s52, %s53
    %p65 = scmp.eq.s32.totalorder %s22, 1
    %p66 = por %p64, %p65
    %p68 = scmp.ne.s32.totalorder %s53, %s67
    %p69 = scmp.eq.s32.totalorder %s22, 0
    %p70 = por %p68, %p69
    %s72 = sadd.s32 %s71, 1
    %p75 = scmp.eq.s32.totalorder %s16, 1
    %p76 = scmp.ne.s32.totalorder %s71, %s73
    %p77 = scmp.eq.s32.totalorder %s16, 0
    %p78 = por %p76, %p77
    %p79 = scmp.ne.s32.totalorder %s71, %s73
    %p80 = scmp.eq.s32.totalorder %s21, 1
    %p81 = por %p79, %p80
    %p82 = scmp.ne.s32.totalorder %s73, %s74
    %p83 = scmp.eq.s32.totalorder %s21, 0
    %p84 = por %p82, %p83
    %p85 = scmp.ne.s32.totalorder %s73, %s74
    %p86 = scmp.eq.s32.totalorder %s22, 1
    %p87 = por %p85, %p86
    %p89 = scmp.ne.s32.totalorder %s74, %s88
    %p90 = scmp.eq.s32.totalorder %s22, 0
    %p91 = por %p89, %p90
    %s93 = sadd.s32 %s92, 1
    %p96 = scmp.eq.s32.totalorder %s16, 1
    %p97 = scmp.ne.s32.totalorder %s92, %s94
    %p98 = scmp.eq.s32.totalorder %s16, 0
    %p99 = por %p97, %p98
    %p100 = scmp.ne.s32.totalorder %s92, %s94
    %p101 = scmp.eq.s32.totalorder %s21, 1
    %p102 = por %p100, %p101
    %p103 = scmp.ne.s32.totalorder %s94, %s95
    %p104 = scmp.eq.s32.totalorder %s21, 0
    %p105 = por %p103, %p104
    %p106 = scmp.ne.s32.totalorder %s94, %s95
    %p107 = scmp.eq.s32.totalorder %s22, 1
    %p108 = por %p106, %p107
    %p110 = scmp.ne.s32.totalorder %s95, %s109
    %p111 = scmp.eq.s32.totalorder %s22, 0
    %p112 = por %p110, %p111
    %s114 = sadd.s32 %s113, 1
    %p117 = scmp.eq.s32.totalorder %s16, 1
    %p118 = scmp.ne.s32.totalorder %s113, %s115
    %p119 = scmp.eq.s32.totalorder %s16, 0
    %p120 = por %p118, %p119
    %p121 = scmp.ne.s32.totalorder %s113, %s115
    %p122 = scmp.eq.s32.totalorder %s21, 1
    %p123 = por %p121, %p122
    %p124 = scmp.ne.s32.totalorder %s115, %s116
    %p125 = scmp.eq.s32.totalorder %s21, 0
    %p126 = por %p124, %p125
    %p127 = scmp.ne.s32.totalorder %s115, %s116
    %p128 = scmp.eq.s32.totalorder %s22, 1
    %p129 = por %p127, %p128
    %p131 = scmp.ne.s32.totalorder %s116, %s130
    %p132 = scmp.eq.s32.totalorder %s22, 0
    %p133 = por %p131, %p132
    %s135 = sadd.s32 %s134, 1
    %p138 = scmp.eq.s32.totalorder %s16, 1
    %p139 = scmp.ne.s32.totalorder %s134, %s136
    %p140 = scmp.eq.s32.totalorder %s16, 0
    %p141 = por %p139, %p140
    %p142 = scmp.ne.s32.totalorder %s134, %s136
    %p143 = scmp.eq.s32.totalorder %s21, 1
    %p144 = por %p142, %p143
    %p145 = scmp.ne.s32.totalorder %s136, %s137
    %p146 = scmp.eq.s32.totalorder %s21, 0
    %p147 = por %p145, %p146
    %p148 = scmp.ne.s32.totalorder %s136, %s137
    %p149 = scmp.eq.s32.totalorder %s22, 1
    %p150 = por %p148, %p149
    %p152 = scmp.ne.s32.totalorder %s137, %s151
    %p153 = scmp.eq.s32.totalorder %s22, 0
    %p154 = por %p152, %p153
    %s156 = sadd.s32 %s155, 1
    %p159 = scmp.eq.s32.totalorder %s16, 1
    %p160 = scmp.ne.s32.totalorder %s155, %s157
    %p161 = scmp.eq.s32.totalorder %s16, 0
    %p162 = por %p160, %p161
    %p163 = scmp.ne.s32.totalorder %s155, %s157
    %p164 = scmp.eq.s32.totalorder %s21, 1
    %p165 = por %p163, %p164
    %p166 = scmp.ne.s32.totalorder %s157, %s158
    %p167 = scmp.eq.s32.totalorder %s21, 0
    %p168 = por %p166, %p167
    %p169 = scmp.ne.s32.totalorder %s157, %s158
    %p170 = scmp.eq.s32.totalorder %s22, 1
    %p171 = por %p169, %p170
    %p173 = scmp.ne.s32.totalorder %s158, %s172
    %p174 = scmp.eq.s32.totalorder %s22, 0
    %p175 = por %p173, %p174
    %s177 = sadd.s32 %s176, 1
    %p180 = scmp.eq.s32.totalorder %s16, 1
    %p181 = scmp.ne.s32.totalorder %s176, %s178
    %p182 = scmp.eq.s32.totalorder %s16, 0
    %p183 = por %p181, %p182
    %p184 = scmp.ne.s32.totalorder %s176, %s178
    %p185 = scmp.eq.s32.totalorder %s21, 1
    %p186 = por %p184, %p185
    %p187 = scmp.ne.s32.totalorder %s178, %s179
    %p188 = scmp.eq.s32.totalorder %s21, 0
    %p189 = por %p187, %p188
    %p190 = scmp.ne.s32.totalorder %s178, %s179
    %p191 = scmp.eq.s32.totalorder %s22, 1
    %p192 = por %p190, %p191
    %p194 = scmp.ne.s32.totalorder %s179, %s193
    %p195 = scmp.eq.s32.totalorder %s22, 0
    %p196 = por %p194, %p195
    %s198 = sadd.s32 %s197, 1
    %p201 = scmp.eq.s32.totalorder %s16, 1
    %p202 = scmp.ne.s32.totalorder %s197, %s199
    %p203 = scmp.eq.s32.totalorder %s16, 0
    %p204 = por %p202, %p203
    %p205 = scmp.ne.s32.totalorder %s197, %s199
    %p206 = scmp.eq.s32.totalorder %s21, 1
    %p207 = por %p205, %p206
    %p208 = scmp.ne.s32.totalorder %s199, %s200
    %p209 = scmp.eq.s32.totalorder %s21, 0
    %p210 = por %p208, %p209
    %p211 = scmp.ne.s32.totalorder %s199, %s200
    %p212 = scmp.eq.s32.totalorder %s22, 1
    %p213 = por %p211, %p212
    %p215 = scmp.ne.s32.totalorder %s200, %s214
    %p216 = scmp.eq.s32.totalorder %s22, 0
    %p217 = por %p215, %p216
    %s219 = sadd.s32 %s218, 1
    %p222 = scmp.eq.s32.totalorder %s16, 1
    %p223 = scmp.ne.s32.totalorder %s218, %s220
    %p224 = scmp.eq.s32.totalorder %s16, 0
    %p225 = por %p223, %p224
    %p226 = scmp.ne.s32.totalorder %s218, %s220
    %p227 = scmp.eq.s32.totalorder %s21, 1
    %p228 = por %p226, %p227
    %p229 = scmp.ne.s32.totalorder %s220, %s221
    %p230 = scmp.eq.s32.totalorder %s21, 0
    %p231 = por %p229, %p230
    %p232 = scmp.ne.s32.totalorder %s220, %s221
    %p233 = scmp.eq.s32.totalorder %s22, 1
    %p234 = por %p232, %p233
    %p236 = scmp.ne.s32.totalorder %s221, %s235
    %p237 = scmp.eq.s32.totalorder %s22, 0
    %p238 = por %p236, %p237
    %s239 = ssub.s32 %s16, %s23
    %p240 = scmp.eq.s32.totalorder %s239, 0
    %s242 = sadd.s32 %s241, 1
    %s243 = scalar_select %p240, %s241, %s242
    %p246 = pneg %p240
    %p247 = scmp.eq.s32.totalorder %s16, 1
    %p248 = por %p246, %p247
    %p249 = scmp.ne.s32.totalorder %s241, %s244
    %p250 = scmp.eq.s32.totalorder %s16, 0
    %p251 = por %p249, %p250
    %p252 = scmp.ne.s32.totalorder %s241, %s244
    %p253 = scmp.eq.s32.totalorder %s21, 1
    %p254 = por %p252, %p253
    %p255 = scmp.ne.s32.totalorder %s244, %s245
    %p256 = scmp.eq.s32.totalorder %s21, 0
    %p257 = por %p255, %p256
    %p258 = scmp.ne.s32.totalorder %s244, %s245
    %p259 = scmp.eq.s32.totalorder %s22, 1
    %p260 = por %p258, %p259
    %p262 = scmp.ne.s32.totalorder %s245, %s261
    %p263 = scmp.eq.s32.totalorder %s22, 0
    %p264 = por %p262, %p263
    %p265 = scmp.le.s32.totalorder 1, %s16
    %p266 = scmp.lt.s32.totalorder %s16, 3
    %p267 = pnand %p265, %p266
    %p268 = pneg %p267
    // Predicated region
    $region9: #{model_n2n_forward.1} parent=5 // pred_check
      _
    $region10: #{model_n2n_forward.1} parent=5 // pred_check_branch
      %270 = sbr.rel (%p267) target = $region12
    $region11: #{model_n2n_forward.1} parent=5 // pred_region
      %s271 = ssub.s32 %s16, 1
      // Predicated region
      $region13: #{model_n2n_forward.1} parent=11 // pred_check
        %p272 = pneg %p63
      $region14: #{model_n2n_forward.1} parent=11 // pred_check_branch
        %274 = sbr.rel (%p272) target = $region16
      $region15: #{model_n2n_forward.1} parent=11 // pred_region
        _
      $region16: #{model_n2n_forward.1} parent=11 // pred_fallthru
        _
      // Predicated region
      $region17: #{model_n2n_forward.1} parent=11 // pred_check
        %p275 = pneg %p84
      $region18: #{model_n2n_forward.1} parent=11 // pred_check_branch
        %277 = sbr.rel (%p275) target = $region20
      $region19: #{model_n2n_forward.1} parent=11 // pred_region
        _
      $region20: #{model_n2n_forward.1} parent=11 // pred_fallthru
        _
      // Predicated region
      $region21: #{model_n2n_forward.1} parent=11 // pred_check
        %p278 = pneg %p105
      $region22: #{model_n2n_forward.1} parent=11 // pred_check_branch
        %280 = sbr.rel (%p278) target = $region24
      $region23: #{model_n2n_forward.1} parent=11 // pred_region
        _
      $region24: #{model_n2n_forward.1} parent=11 // pred_fallthru
        _
      // Predicated region
      $region25: #{model_n2n_forward.1} parent=11 // pred_check
        %p281 = pneg %p126
      $region26: #{model_n2n_forward.1} parent=11 // pred_check_branch
        %283 = sbr.rel (%p281) target = $region28
      $region27: #{model_n2n_forward.1} parent=11 // pred_region
        _
      $region28: #{model_n2n_forward.1} parent=11 // pred_fallthru
        _
      // Predicated region
      $region29: #{model_n2n_forward.1} parent=11 // pred_check
        %p284 = pneg %p147
      $region30: #{model_n2n_forward.1} parent=11 // pred_check_branch
        %286 = sbr.rel (%p284) target = $region32
      $region31: #{model_n2n_forward.1} parent=11 // pred_region
        _
      $region32: #{model_n2n_forward.1} parent=11 // pred_fallthru
        _
      // Predicated region
      $region33: #{model_n2n_forward.1} parent=11 // pred_check
        %p287 = pneg %p168
      $region34: #{model_n2n_forward.1} parent=11 // pred_check_branch
        %289 = sbr.rel (%p287) target = $region36
      $region35: #{model_n2n_forward.1} parent=11 // pred_region
        _
      $region36: #{model_n2n_forward.1} parent=11 // pred_fallthru
        _
      // Predicated region
      $region37: #{model_n2n_forward.1} parent=11 // pred_check
        %p290 = pneg %p189
      $region38: #{model_n2n_forward.1} parent=11 // pred_check_branch
        %292 = sbr.rel (%p290) target = $region40
      $region39: #{model_n2n_forward.1} parent=11 // pred_region
        _
      $region40: #{model_n2n_forward.1} parent=11 // pred_fallthru
        _
      // Predicated region
      $region41: #{model_n2n_forward.1} parent=11 // pred_check
        %p293 = pneg %p210
      $region42: #{model_n2n_forward.1} parent=11 // pred_check_branch
        %295 = sbr.rel (%p293) target = $region44
      $region43: #{model_n2n_forward.1} parent=11 // pred_region
        _
      $region44: #{model_n2n_forward.1} parent=11 // pred_fallthru
        _
      // Predicated region
      $region45: #{model_n2n_forward.1} parent=11 // pred_check
        %p296 = pneg %p231
      $region46: #{model_n2n_forward.1} parent=11 // pred_check_branch
        %298 = sbr.rel (%p296) target = $region48
      $region47: #{model_n2n_forward.1} parent=11 // pred_region
        _
      $region48: #{model_n2n_forward.1} parent=11 // pred_fallthru
        _
    $region12: #{model_n2n_forward.1} parent=5 // pred_fallthru
      _
    %p299 = scmp.lt.s32.totalorder %s16, 2
    // Predicated region
    $region49: #{model_n2n_forward.1} parent=5 // pred_check
      %p300 = pneg %p299
    $region50: #{model_n2n_forward.1} parent=5 // pred_check_branch
      %302 = sbr.rel (%p300) target = $region52
    $region51: #{model_n2n_forward.1} parent=5 // pred_region
      // Predicated region
      $region53: #{model_n2n_forward.1} parent=51 // pred_check
        %p303 = pneg %p36
      $region54: #{model_n2n_forward.1} parent=51 // pred_check_branch
        %305 = sbr.rel (%p303) target = $region56
      $region55: #{model_n2n_forward.1} parent=51 // pred_region
        %s306 = smul.u32 2, %s16
        %p307 = scmp.lt.s32.totalorder %s306, 3
        %s308 = scalar_select %p307, %s306, 3
        %s309 = smul.addr %s308, 8
        %s310 = scalar_lea.vmem %s0, %s309
        %s311 = smul.u32 2, %s16
      $region56: #{model_n2n_forward.1} parent=51 // pred_fallthru
        _
    $region52: #{model_n2n_forward.1} parent=5 // pred_fallthru
      _
    %p312 = scmp.le.s32.totalorder 1, %s16
    %p313 = scmp.lt.s32.totalorder %s16, 3
    %p314 = pnand %p312, %p313
    %p315 = pneg %p314
    // Predicated region
    $region57: #{model_n2n_forward.1} parent=5 // pred_check
      _
    $region58: #{model_n2n_forward.1} parent=5 // pred_check_branch
      %317 = sbr.rel (%p314) target = $region60
    $region59: #{model_n2n_forward.1} parent=5 // pred_region
      %s318 = ssub.s32 %s16, 1
      %s319 = smul.u32 2, %s21
      %p320 = scmp.lt.s32.totalorder %s319, 3
      %s321 = scalar_select %p320, %s319, 3
      %s322 = smul.addr %s321, 8
      %s323 = scalar_lea.vmem %s0, %s322
      %p324 = pneg %p42
      %p325 = pneg %p39
      %p326 = pneg %p63
      %p327 = pneg %p60
      %p328 = pneg %p84
      %p329 = pneg %p81
      %p330 = pneg %p105
      %p331 = pneg %p102
      %p332 = pneg %p126
      %p333 = pneg %p123
      %p334 = pneg %p147
      %p335 = pneg %p144
      %p336 = pneg %p168
      %p337 = pneg %p165
      %p338 = pneg %p189
      %p339 = pneg %p186
      %p340 = pneg %p210
      %p341 = pneg %p207
      %p342 = pneg %p231
      %p343 = pneg %p228
      %p344 = pneg %p257
      %p345 = pneg %p254
      %s346 = smul.u32 2, %s21
      %p347 = scmp.lt.s32.totalorder %s346, 3
      %s348 = scalar_select %p347, %s346, 3
      %s349 = smul.addr %s348, 4
      %s350 = scalar_lea.vmem %s10, %s349
      %s351 = smul.u32 2, %s21
      %p352 = scmp.lt.s32.totalorder %s351, 3
      %s353 = scalar_select %p352, %s351, 3
      %s354 = smul.addr %s353, 8
      %s355 = scalar_lea.vmem %s0, %s354
      %s356 = smul.u32 2, %s21
      %s357 = smul.u32 2, %s21
      %p358 = scmp.lt.s32.totalorder %s357, 3
      %s359 = scalar_select %p358, %s357, 3
      %s360 = smul.addr %s359, 4
      %s361 = scalar_lea.vmem %s10, %s360
      %s362 = smul.u32 2, %s21
      %v364 = vld [vmem:[%s355] sm:$0xff]
      %v365 = vld [vmem:[%s355 + $0x8] sm:$0xff]
      %v366 = vpack.c.bf16 %v365, %v364
      %v367 = vld [vmem:[%s1] sm:$0xff]
      %v368 = vld [vmem:[%s1 + $0x8] sm:$0xff]
      %v369 = vld [vmem:[%s1 + $0x10] sm:$0xff]
      %v370 = vld [vmem:[%s1 + $0x18] sm:$0xff]
      %v371 = vld [vmem:[%s1 + $0x20] sm:$0xff]
      %v372 = vld [vmem:[%s1 + $0x28] sm:$0xff]
      %v373 = vld [vmem:[%s1 + $0x30] sm:$0xff]
      %v374 = vld [vmem:[%s1 + $0x38] sm:$0xff]
      %v375 = vld [vmem:[%s1 + $0x40] sm:$0xff]
      %v376 = vld [vmem:[%s1 + $0x48] sm:$0xff]
      %v377 = vld [vmem:[%s1 + $0x50] sm:$0xff]
      %v378 = vld [vmem:[%s1 + $0x58] sm:$0xff]
      %v379 = vld [vmem:[%s2] sm:$0x3f]
      %v381 = vlaneseq
      %v382 = vshrl.u32 %v381, 7
      %v383 = vsub.s32 0, %v382
      %v384 = vrot.slane %v379, %v383
      %v385 = vlaneseq
      %v386 = vshrl.u32 %v385, 7
      %v387 = vsub.s32 1, %v386
      %v388 = vrot.slane %v379, %v387
      %v389 = vlaneseq
      %v390 = vshrl.u32 %v389, 7
      %v391 = vsub.s32 2, %v390
      %v392 = vrot.slane %v379, %v391
      %v393 = vlaneseq
      %v394 = vshrl.u32 %v393, 7
      %v395 = vsub.s32 3, %v394
      %v396 = vrot.slane %v379, %v395
      %v397 = vlaneseq
      %v398 = vshrl.u32 %v397, 7
      %v399 = vsub.s32 4, %v398
      %v400 = vrot.slane %v379, %v399
      %v401 = vlaneseq
      %v402 = vshrl.u32 %v401, 7
      %v403 = vsub.s32 5, %v402
      %v404 = vrot.slane %v379, %v403
      %v423 = vunpack.c.l.b16 %v367
      %v424 = vunpack.c.h.b16 %v367
      %v425 = vunpack.c.l.b16 %v368
      %v426 = vunpack.c.h.b16 %v368
      %v427 = vunpack.c.l.b16 %v369
      %v428 = vunpack.c.h.b16 %v369
      %v429 = vunpack.c.l.b16 %v370
      %v430 = vunpack.c.h.b16 %v370
      %v431 = vunpack.c.l.b16 %v371
      %v432 = vunpack.c.h.b16 %v371
      %v433 = vunpack.c.l.b16 %v372
      %v434 = vunpack.c.h.b16 %v372
      %v435 = vunpack.c.l.b16 %v373
      %v436 = vunpack.c.h.b16 %v373
      %v437 = vunpack.c.l.b16 %v374
      %v438 = vunpack.c.h.b16 %v374
      %v439 = vunpack.c.l.b16 %v375
      %v440 = vunpack.c.h.b16 %v375
      %v441 = vunpack.c.l.b16 %v376
      %v442 = vunpack.c.h.b16 %v376
      %v443 = vunpack.c.l.b16 %v377
      %v444 = vunpack.c.h.b16 %v377
      %v445 = vunpack.c.l.b16 %v378
      %v446 = vunpack.c.h.b16 %v378
      %v447 = vpack.c.b16 %v429, %v423
      %v448 = vpack.c.b16 %v430, %v424
      %v449 = vpack.c.b16 %v431, %v425
      %v450 = vpack.c.b16 %v432, %v426
      %v451 = vpack.c.b16 %v433, %v427
      %v452 = vpack.c.b16 %v434, %v428
      %v453 = vpack.c.b16 %v441, %v435
      %v454 = vpack.c.b16 %v442, %v436
      %v455 = vpack.c.b16 %v443, %v437
      %v456 = vpack.c.b16 %v444, %v438
      %v457 = vpack.c.b16 %v445, %v439
      %v458 = vpack.c.b16 %v446, %v440
      %vm471 = vcmask 261120
      %v473 = vsel %vm471, %v366, 0
      %475 = vmatprep.subr.bf16.mxu0 %v448
      %476 = vmatpush1.bf16.msra.mxu0 %v447
      %477 = vmatprep.subr.bf16.mxu0 %v454
      %478 = vmatpush1.bf16.msra.mxu0 %v453
      %479 = vmatprep.subr.bf16.mxu0 0
      %480 = vmatpush1.bf16.msra.mxu0 0
      %481 = vmatprep.subr.bf16.mxu0 0
      %482 = vmatpush1.bf16.msra.mxu0 0
      %483 = vmatprep.subr.bf16.mxu0 0
      %484 = vmatpush1.bf16.msra.mxu0 0
      %485 = vmatprep.subr.bf16.mxu0 0
      %486 = vmatpush1.bf16.msra.mxu0 0
      %487 = vmatprep.subr.bf16.mxu0 0
      %488 = vmatpush1.bf16.msra.mxu0 0
      %489 = vmatprep.subr.bf16.mxu0 0
      %490 = vmatpush1.bf16.msra.mxu0 0
      %491 = vmatprep.subr.bf16.mxu0 0
      %492 = vmatpush1.bf16.msra.mxu0 0
      %493 = vmatprep.subr.bf16.mxu0 0
      %494 = vmatpush1.bf16.msra.mxu0 0
      %495 = vmatprep.subr.bf16.mxu0 0
      %496 = vmatpush1.bf16.msra.mxu0 0
      %497 = vmatprep.subr.bf16.mxu0 0
      %498 = vmatpush1.bf16.msra.mxu0 0
      %499 = vmatprep.subr.bf16.mxu0 0
      %500 = vmatpush1.bf16.msra.mxu0 0
      %501 = vmatprep.subr.bf16.mxu0 0
      %502 = vmatpush1.bf16.msra.mxu0 0
      %503 = vmatprep.subr.bf16.mxu0 0
      %504 = vmatpush1.bf16.msra.mxu0 0
      %505 = vmatprep.subr.bf16.mxu0 0
      %506 = vmatpush1.bf16.msra.mxu0 0
      %507 = vmatprep.mubr.bf16.mxu0 0
      %508 = vmatmul.mubr.bf16.gmra.mrb[0].mxu0 %v473
      %v509 = vpop.f32.mrb[0].mxu0
      %v510 = vadd.f32 %v384, %v509
      %v511 = vpop.f32.mrb[0].mxu0
      %v512 = vadd.f32 %v388, %v511
      %v513 = vpop.f32.mrb[0].mxu0
      %v514 = vadd.f32 %v384, %v513
      %v515 = vpop.f32.mrb[0].mxu0
      %v516 = vadd.f32 %v388, %v515
      %517 = vdwg.mxu0
      %518 = vmatprep.subr.bf16.mxu0 %v450
      %519 = vmatpush1.bf16.msra.mxu0 %v449
      %520 = vmatprep.subr.bf16.mxu0 %v456
      %521 = vmatpush1.bf16.msra.mxu0 %v455
      %522 = vmatprep.subr.bf16.mxu0 0
      %523 = vmatpush1.bf16.msra.mxu0 0
      %524 = vmatprep.subr.bf16.mxu0 0
      %525 = vmatpush1.bf16.msra.mxu0 0
      %526 = vmatprep.subr.bf16.mxu0 0
      %527 = vmatpush1.bf16.msra.mxu0 0
      %528 = vmatprep.subr.bf16.mxu0 0
      %529 = vmatpush1.bf16.msra.mxu0 0
      %530 = vmatprep.subr.bf16.mxu0 0
      %531 = vmatpush1.bf16.msra.mxu0 0
      %532 = vmatprep.subr.bf16.mxu0 0
      %533 = vmatpush1.bf16.msra.mxu0 0
      %534 = vmatprep.subr.bf16.mxu0 0
      %535 = vmatpush1.bf16.msra.mxu0 0
      %536 = vmatprep.subr.bf16.mxu0 0
      %537 = vmatpush1.bf16.msra.mxu0 0
      %538 = vmatprep.subr.bf16.mxu0 0
      %539 = vmatpush1.bf16.msra.mxu0 0
      %540 = vmatprep.subr.bf16.mxu0 0
      %541 = vmatpush1.bf16.msra.mxu0 0
      %542 = vmatprep.subr.bf16.mxu0 0
      %543 = vmatpush1.bf16.msra.mxu0 0
      %544 = vmatprep.subr.bf16.mxu0 0
      %545 = vmatpush1.bf16.msra.mxu0 0
      %546 = vmatprep.subr.bf16.mxu0 0
      %547 = vmatpush1.bf16.msra.mxu0 0
      %548 = vmatprep.subr.bf16.mxu0 0
      %549 = vmatpush1.bf16.msra.mxu0 0
      %550 = vmatprep.mubr.bf16.mxu0 0
      %551 = vmatmul.mubr.bf16.gmra.mrb[0].mxu0 %v473
      %v552 = vpop.f32.mrb[0].mxu0
      %v553 = vadd.f32 %v392, %v552
      %v554 = vpop.f32.mrb[0].mxu0
      %v555 = vadd.f32 %v396, %v554
      %v556 = vpop.f32.mrb[0].mxu0
      %v557 = vadd.f32 %v392, %v556
      %v558 = vpop.f32.mrb[0].mxu0
      %v559 = vadd.f32 %v396, %v558
      %560 = vdwg.mxu0
      %561 = vmatprep.subr.bf16.mxu0 %v452
      %562 = vmatpush1.bf16.msra.mxu0 %v451
      %563 = vmatprep.subr.bf16.mxu0 %v458
      %564 = vmatpush1.bf16.msra.mxu0 %v457
      %565 = vmatprep.subr.bf16.mxu0 0
      %566 = vmatpush1.bf16.msra.mxu0 0
      %567 = vmatprep.subr.bf16.mxu0 0
      %568 = vmatpush1.bf16.msra.mxu0 0
      %569 = vmatprep.subr.bf16.mxu0 0
      %570 = vmatpush1.bf16.msra.mxu0 0
      %571 = vmatprep.subr.bf16.mxu0 0
      %572 = vmatpush1.bf16.msra.mxu0 0
      %573 = vmatprep.subr.bf16.mxu0 0
      %574 = vmatpush1.bf16.msra.mxu0 0
      %575 = vmatprep.subr.bf16.mxu0 0
      %576 = vmatpush1.bf16.msra.mxu0 0
      %577 = vmatprep.subr.bf16.mxu0 0
      %578 = vmatpush1.bf16.msra.mxu0 0
      %579 = vmatprep.subr.bf16.mxu0 0
      %580 = vmatpush1.bf16.msra.mxu0 0
      %581 = vmatprep.subr.bf16.mxu0 0
      %582 = vmatpush1.bf16.msra.mxu0 0
      %583 = vmatprep.subr.bf16.mxu0 0
      %584 = vmatpush1.bf16.msra.mxu0 0
      %585 = vmatprep.subr.bf16.mxu0 0
      %586 = vmatpush1.bf16.msra.mxu0 0
      %587 = vmatprep.subr.bf16.mxu0 0
      %588 = vmatpush1.bf16.msra.mxu0 0
      %589 = vmatprep.subr.bf16.mxu0 0
      %590 = vmatpush1.bf16.msra.mxu0 0
      %591 = vmatprep.subr.bf16.mxu0 0
      %592 = vmatpush1.bf16.msra.mxu0 0
      %593 = vmatprep.mubr.bf16.mxu0 0
      %594 = vmatmul.mubr.bf16.gmra.mrb[0].mxu0 %v473
      %v595 = vpop.f32.mrb[0].mxu0
      %v596 = vadd.f32 %v400, %v595
      %v597 = vpop.f32.mrb[0].mxu0
      %v598 = vadd.f32 %v404, %v597
      %v599 = vpop.f32.mrb[0].mxu0
      %v600 = vadd.f32 %v400, %v599
      %v601 = vpop.f32.mrb[0].mxu0
      %v602 = vadd.f32 %v404, %v601
      %603 = vdwg.mxu0
      %vm604 = vcmp.gt.f32.partialorder %v510, 0.0
      %vm605 = vcmp.gt.f32.partialorder %v512, 0.0
      %vm606 = vcmp.gt.f32.partialorder %v553, 0.0
      %vm607 = vcmp.gt.f32.partialorder %v555, 0.0
      %vm608 = vcmp.gt.f32.partialorder %v596, 0.0
      %vm609 = vcmp.gt.f32.partialorder %v598, 0.0
      %vm610 = vcmp.gt.f32.partialorder %v514, 0.0
      %vm611 = vcmp.gt.f32.partialorder %v516, 0.0
      %vm612 = vcmp.gt.f32.partialorder %v557, 0.0
      %vm613 = vcmp.gt.f32.partialorder %v559, 0.0
      %vm614 = vcmp.gt.f32.partialorder %v600, 0.0
      %vm615 = vcmp.gt.f32.partialorder %v602, 0.0
      %v616 = vmul.f32 %v510, 1.442695
      %v617 = vpow.pop %v616
      %v618 = vmul.f32 %v512, 1.442695
      %v619 = vpow.pop %v618
      %v620 = vmul.f32 %v553, 1.442695
      %v621 = vpow.pop %v620
      %v622 = vmul.f32 %v555, 1.442695
      %v623 = vpow.pop %v622
      %v624 = vmul.f32 %v596, 1.442695
      %v625 = vpow.pop %v624
      %v626 = vmul.f32 %v598, 1.442695
      %v627 = vpow.pop %v626
      %v628 = vmul.f32 %v514, 1.442695
      %v629 = vpow.pop %v628
      %v630 = vmul.f32 %v516, 1.442695
      %v631 = vpow.pop %v630
      %v632 = vmul.f32 %v557, 1.442695
      %v633 = vpow.pop %v632
      %v634 = vmul.f32 %v559, 1.442695
      %v635 = vpow.pop %v634
      %v636 = vmul.f32 %v600, 1.442695
      %v637 = vpow.pop %v636
      %v638 = vmul.f32 %v602, 1.442695
      %v639 = vpow.pop %v638
      %v640 = vsub.f32 %v617, 1.0
      %v641 = vsub.f32 %v619, 1.0
      %v642 = vsub.f32 %v621, 1.0
      %v643 = vsub.f32 %v623, 1.0
      %v644 = vsub.f32 %v625, 1.0
      %v645 = vsub.f32 %v627, 1.0
      %v646 = vsub.f32 %v629, 1.0
      %v647 = vsub.f32 %v631, 1.0
      %v648 = vsub.f32 %v633, 1.0
      %v649 = vsub.f32 %v635, 1.0
      %v650 = vsub.f32 %v637, 1.0
      %v651 = vsub.f32 %v639, 1.0
      %v652 = vsel %vm604, %v510, %v640
      %v653 = vsel %vm605, %v512, %v641
      %v654 = vsel %vm606, %v553, %v642
      %v655 = vsel %vm607, %v555, %v643
      %v656 = vsel %vm608, %v596, %v644
      %v657 = vsel %vm609, %v598, %v645
      %v658 = vsel %vm610, %v514, %v646
      %v659 = vsel %vm611, %v516, %v647
      %v660 = vsel %vm612, %v557, %v648
      %v661 = vsel %vm613, %v559, %v649
      %v662 = vsel %vm614, %v600, %v650
      %v663 = vsel %vm615, %v602, %v651
      %v664 = vpack.c.bf16 %v658, %v652
      %v665 = vpack.c.bf16 %v659, %v653
      %v666 = vpack.c.bf16 %v660, %v654
      %v667 = vpack.c.bf16 %v661, %v655
      %v668 = vpack.c.bf16 %v662, %v656
      %v669 = vpack.c.bf16 %v663, %v657
      %v670 = vld [vmem:[%s3] sm:$0xf]
      %v671 = vld [vmem:[%s3 + $0x4] sm:$0xf]
      %v672 = vld [vmem:[%s3 + $0x8] sm:$0xf]
      %v673 = vld [vmem:[%s3 + $0xc] sm:$0xf]
      %v674 = vld [vmem:[%s3 + $0x10] sm:$0xf]
      %v675 = vld [vmem:[%s3 + $0x14] sm:$0xf]
      %v676 = vld [vmem:[%s3 + $0x18] sm:$0xf]
      %v677 = vld [vmem:[%s3 + $0x1c] sm:$0xf]
      %v678 = vld [vmem:[%s3 + $0x20] sm:$0xf]
      %v679 = vld [vmem:[%s3 + $0x24] sm:$0xf]
      %v680 = vld [vmem:[%s3 + $0x28] sm:$0xf]
      %v681 = vld [vmem:[%s3 + $0x2c] sm:$0xf]
      %v682 = vld [vmem:[%s3 + $0x30] sm:$0xf]
      %v683 = vld [vmem:[%s3 + $0x34] sm:$0xf]
      %v684 = vld [vmem:[%s3 + $0x38] sm:$0xf]
      %v685 = vld [vmem:[%s3 + $0x3c] sm:$0xf]
      %v686 = vld [vmem:[%s3 + $0x40] sm:$0xf]
      %v687 = vld [vmem:[%s3 + $0x44] sm:$0xf]
      %v688 = vld [vmem:[%s3 + $0x48] sm:$0xf]
      %v689 = vld [vmem:[%s3 + $0x4c] sm:$0xf]
      %v690 = vld [vmem:[%s3 + $0x50] sm:$0xf]
      %v691 = vld [vmem:[%s3 + $0x54] sm:$0xf]
      %v692 = vld [vmem:[%s3 + $0x58] sm:$0xf]
      %v693 = vld [vmem:[%s3 + $0x5c] sm:$0xf]
      %v694 = vld [vmem:[%s3 + $0x60] sm:$0xf]
      %v695 = vld [vmem:[%s3 + $0x64] sm:$0xf]
      %v696 = vld [vmem:[%s3 + $0x68] sm:$0xf]
      %v697 = vld [vmem:[%s3 + $0x6c] sm:$0xf]
      %v698 = vld [vmem:[%s3 + $0x70] sm:$0xf]
      %v699 = vld [vmem:[%s3 + $0x74] sm:$0xf]
      %v700 = vld [vmem:[%s3 + $0x78] sm:$0xf]
      %v701 = vld [vmem:[%s3 + $0x7c] sm:$0xf]
      %v702 = vld [vmem:[%s3 + $0x80] sm:$0xf]
      %v703 = vld [vmem:[%s3 + $0x84] sm:$0xf]
      %v704 = vld [vmem:[%s3 + $0x88] sm:$0xf]
      %v705 = vld [vmem:[%s3 + $0x8c] sm:$0xf]
      %v706 = vld [vmem:[%s3 + $0x90] sm:$0xf]
      %v707 = vld [vmem:[%s3 + $0x94] sm:$0xf]
      %v708 = vld [vmem:[%s3 + $0x98] sm:$0xf]
      %v709 = vld [vmem:[%s3 + $0x9c] sm:$0xf]
      %v710 = vld [vmem:[%s3 + $0xa0] sm:$0xf]
      %v711 = vld [vmem:[%s3 + $0xa4] sm:$0xf]
      %v712 = vld [vmem:[%s3 + $0xa8] sm:$0xf]
      %v713 = vld [vmem:[%s3 + $0xac] sm:$0xf]
      %v714 = vld [vmem:[%s3 + $0xb0] sm:$0xf]
      %v715 = vld [vmem:[%s3 + $0xb4] sm:$0xf]
      %v716 = vld [vmem:[%s3 + $0xb8] sm:$0xf]
      %v717 = vld [vmem:[%s3 + $0xbc] sm:$0xf]
      %v718 = vld [vmem:[%s3 + $0xc0] sm:$0xf]
      %v719 = vld [vmem:[%s3 + $0xc4] sm:$0xf]
      %v720 = vld [vmem:[%s3 + $0xc8] sm:$0xf]
      %v721 = vld [vmem:[%s3 + $0xcc] sm:$0xf]
      %v722 = vld [vmem:[%s3 + $0xd0] sm:$0xf]
      %v723 = vld [vmem:[%s3 + $0xd4] sm:$0xf]
      %v724 = vld [vmem:[%s3 + $0xd8] sm:$0xf]
      %v725 = vld [vmem:[%s3 + $0xdc] sm:$0xf]
      %v726 = vld [vmem:[%s3 + $0xe0] sm:$0xf]
      %v727 = vld [vmem:[%s3 + $0xe4] sm:$0xf]
      %v728 = vld [vmem:[%s3 + $0xe8] sm:$0xf]
      %v729 = vld [vmem:[%s3 + $0xec] sm:$0xf]
      %v730 = vld [vmem:[%s3 + $0xf0] sm:$0xf]
      %v731 = vld [vmem:[%s3 + $0xf4] sm:$0xf]
      %v732 = vld [vmem:[%s3 + $0xf8] sm:$0xf]
      %v733 = vld [vmem:[%s3 + $0xfc] sm:$0xf]
      %v734 = vld [vmem:[%s3 + $0x100] sm:$0xf]
      %v735 = vld [vmem:[%s3 + $0x104] sm:$0xf]
      %v736 = vld [vmem:[%s3 + $0x108] sm:$0xf]
      %v737 = vld [vmem:[%s3 + $0x10c] sm:$0xf]
      %v738 = vld [vmem:[%s3 + $0x110] sm:$0xf]
      %v739 = vld [vmem:[%s3 + $0x114] sm:$0xf]
      %v740 = vld [vmem:[%s3 + $0x118] sm:$0xf]
      %v741 = vld [vmem:[%s3 + $0x11c] sm:$0xf]
      %v742 = vld [vmem:[%s3 + $0x120] sm:$0xf]
      %v743 = vld [vmem:[%s3 + $0x124] sm:$0xf]
      %v744 = vld [vmem:[%s3 + $0x128] sm:$0xf]
      %v745 = vld [vmem:[%s3 + $0x12c] sm:$0xf]
      %v746 = vld [vmem:[%s3 + $0x130] sm:$0xf]
      %v747 = vld [vmem:[%s3 + $0x134] sm:$0xf]
      %v748 = vld [vmem:[%s3 + $0x138] sm:$0xf]
      %v749 = vld [vmem:[%s3 + $0x13c] sm:$0xf]
      %v750 = vld [vmem:[%s3 + $0x140] sm:$0xf]
      %v751 = vld [vmem:[%s3 + $0x144] sm:$0xf]
      %v752 = vld [vmem:[%s3 + $0x148] sm:$0xf]
      %v753 = vld [vmem:[%s3 + $0x14c] sm:$0xf]
      %v754 = vld [vmem:[%s3 + $0x150] sm:$0xf]
      %v755 = vld [vmem:[%s3 + $0x154] sm:$0xf]
      %v756 = vld [vmem:[%s3 + $0x158] sm:$0xf]
      %v757 = vld [vmem:[%s3 + $0x15c] sm:$0xf]
      %v758 = vld [vmem:[%s3 + $0x160] sm:$0xf]
      %v759 = vld [vmem:[%s3 + $0x164] sm:$0xf]
      %v760 = vld [vmem:[%s3 + $0x168] sm:$0xf]
      %v761 = vld [vmem:[%s3 + $0x16c] sm:$0xf]
      %v762 = vld [vmem:[%s3 + $0x170] sm:$0xf]
      %v763 = vld [vmem:[%s3 + $0x174] sm:$0xf]
      %v764 = vld [vmem:[%s3 + $0x178] sm:$0xf]
      %v765 = vld [vmem:[%s3 + $0x17c] sm:$0xf]
      %v766 = vld [vmem:[%s4] sm:$0x1]
      %v768 = vlaneseq
      %v769 = vshrl.u32 %v768, 7
      %v770 = vsub.s32 0, %v769
      %v771 = vrot.slane %v766, %v770
      %v869 = vunpack.c.l.b16 %v670
      %v870 = vunpack.c.l.b16 %v671
      %v871 = vunpack.c.l.b16 %v672
      %v872 = vunpack.c.l.b16 %v673
      %v873 = vunpack.c.l.b16 %v674
      %v874 = vunpack.c.l.b16 %v675
      %v875 = vunpack.c.l.b16 %v676
      %v876 = vunpack.c.l.b16 %v677
      %v877 = vunpack.c.l.b16 %v678
      %v878 = vunpack.c.l.b16 %v679
      %v879 = vunpack.c.l.b16 %v680
      %v880 = vunpack.c.l.b16 %v681
      %v881 = vunpack.c.l.b16 %v682
      %v882 = vunpack.c.l.b16 %v683
      %v883 = vunpack.c.l.b16 %v684
      %v884 = vunpack.c.l.b16 %v685
      %v885 = vunpack.c.l.b16 %v686
      %v886 = vunpack.c.l.b16 %v687
      %v887 = vunpack.c.l.b16 %v688
      %v888 = vunpack.c.l.b16 %v689
      %v889 = vunpack.c.l.b16 %v690
      %v890 = vunpack.c.l.b16 %v691
      %v891 = vunpack.c.l.b16 %v692
      %v892 = vunpack.c.l.b16 %v693
      %v893 = vunpack.c.l.b16 %v694
      %v894 = vunpack.c.l.b16 %v695
      %v895 = vunpack.c.l.b16 %v696
      %v896 = vunpack.c.l.b16 %v697
      %v897 = vunpack.c.l.b16 %v698
      %v898 = vunpack.c.l.b16 %v699
      %v899 = vunpack.c.l.b16 %v700
      %v900 = vunpack.c.l.b16 %v701
      %v901 = vunpack.c.l.b16 %v702
      %v902 = vunpack.c.l.b16 %v703
      %v903 = vunpack.c.l.b16 %v704
      %v904 = vunpack.c.l.b16 %v705
      %v905 = vunpack.c.l.b16 %v706
      %v906 = vunpack.c.l.b16 %v707
      %v907 = vunpack.c.l.b16 %v708
      %v908 = vunpack.c.l.b16 %v709
      %v909 = vunpack.c.l.b16 %v710
      %v910 = vunpack.c.l.b16 %v711
      %v911 = vunpack.c.l.b16 %v712
      %v912 = vunpack.c.l.b16 %v713
      %v913 = vunpack.c.l.b16 %v714
      %v914 = vunpack.c.l.b16 %v715
      %v915 = vunpack.c.l.b16 %v716
      %v916 = vunpack.c.l.b16 %v717
      %v917 = vunpack.c.l.b16 %v718
      %v918 = vunpack.c.l.b16 %v719
      %v919 = vunpack.c.l.b16 %v720
      %v920 = vunpack.c.l.b16 %v721
      %v921 = vunpack.c.l.b16 %v722
      %v922 = vunpack.c.l.b16 %v723
      %v923 = vunpack.c.l.b16 %v724
      %v924 = vunpack.c.l.b16 %v725
      %v925 = vunpack.c.l.b16 %v726
      %v926 = vunpack.c.l.b16 %v727
      %v927 = vunpack.c.l.b16 %v728
      %v928 = vunpack.c.l.b16 %v729
      %v929 = vunpack.c.l.b16 %v730
      %v930 = vunpack.c.l.b16 %v731
      %v931 = vunpack.c.l.b16 %v732
      %v932 = vunpack.c.l.b16 %v733
      %v933 = vunpack.c.l.b16 %v734
      %v934 = vunpack.c.l.b16 %v735
      %v935 = vunpack.c.l.b16 %v736
      %v936 = vunpack.c.l.b16 %v737
      %v937 = vunpack.c.l.b16 %v738
      %v938 = vunpack.c.l.b16 %v739
      %v939 = vunpack.c.l.b16 %v740
      %v940 = vunpack.c.l.b16 %v741
      %v941 = vunpack.c.l.b16 %v742
      %v942 = vunpack.c.l.b16 %v743
      %v943 = vunpack.c.l.b16 %v744
      %v944 = vunpack.c.l.b16 %v745
      %v945 = vunpack.c.l.b16 %v746
      %v946 = vunpack.c.l.b16 %v747
      %v947 = vunpack.c.l.b16 %v748
      %v948 = vunpack.c.l.b16 %v749
      %v949 = vunpack.c.l.b16 %v750
      %v950 = vunpack.c.l.b16 %v751
      %v951 = vunpack.c.l.b16 %v752
      %v952 = vunpack.c.l.b16 %v753
      %v953 = vunpack.c.l.b16 %v754
      %v954 = vunpack.c.l.b16 %v755
      %v955 = vunpack.c.l.b16 %v756
      %v956 = vunpack.c.l.b16 %v757
      %v957 = vunpack.c.l.b16 %v758
      %v958 = vunpack.c.l.b16 %v759
      %v959 = vunpack.c.l.b16 %v760
      %v960 = vunpack.c.l.b16 %v761
      %v961 = vunpack.c.l.b16 %v762
      %v962 = vunpack.c.l.b16 %v763
      %v963 = vunpack.c.l.b16 %v764
      %v964 = vunpack.c.l.b16 %v765
      %v965 = vpack.c.b16 %v870, %v869
      %v966 = vpack.c.b16 %v872, %v871
      %v967 = vpack.c.b16 %v874, %v873
      %v968 = vpack.c.b16 %v876, %v875
      %v969 = vpack.c.b16 %v878, %v877
      %v970 = vpack.c.b16 %v880, %v879
      %v971 = vpack.c.b16 %v882, %v881
      %v972 = vpack.c.b16 %v884, %v883
      %v973 = vpack.c.b16 %v886, %v885
      %v974 = vpack.c.b16 %v888, %v887
      %v975 = vpack.c.b16 %v890, %v889
      %v976 = vpack.c.b16 %v892, %v891
      %v977 = vpack.c.b16 %v894, %v893
      %v978 = vpack.c.b16 %v896, %v895
      %v979 = vpack.c.b16 %v898, %v897
      %v980 = vpack.c.b16 %v900, %v899
      %v981 = vpack.c.b16 %v902, %v901
      %v982 = vpack.c.b16 %v904, %v903
      %v983 = vpack.c.b16 %v906, %v905
      %v984 = vpack.c.b16 %v908, %v907
      %v985 = vpack.c.b16 %v910, %v909
      %v986 = vpack.c.b16 %v912, %v911
      %v987 = vpack.c.b16 %v914, %v913
      %v988 = vpack.c.b16 %v916, %v915
      %v989 = vpack.c.b16 %v918, %v917
      %v990 = vpack.c.b16 %v920, %v919
      %v991 = vpack.c.b16 %v922, %v921
      %v992 = vpack.c.b16 %v924, %v923
      %v993 = vpack.c.b16 %v926, %v925
      %v994 = vpack.c.b16 %v928, %v927
      %v995 = vpack.c.b16 %v930, %v929
      %v996 = vpack.c.b16 %v932, %v931
      %v997 = vpack.c.b16 %v934, %v933
      %v998 = vpack.c.b16 %v936, %v935
      %v999 = vpack.c.b16 %v938, %v937
      %v1000 = vpack.c.b16 %v940, %v939
      %v1001 = vpack.c.b16 %v942, %v941
      %v1002 = vpack.c.b16 %v944, %v943
      %v1003 = vpack.c.b16 %v946, %v945
      %v1004 = vpack.c.b16 %v948, %v947
      %v1005 = vpack.c.b16 %v950, %v949
      %v1006 = vpack.c.b16 %v952, %v951
      %v1007 = vpack.c.b16 %v954, %v953
      %v1008 = vpack.c.b16 %v956, %v955
      %v1009 = vpack.c.b16 %v958, %v957
      %v1010 = vpack.c.b16 %v960, %v959
      %v1011 = vpack.c.b16 %v962, %v961
      %v1012 = vpack.c.b16 %v964, %v963
      %1061 = vmatprep.subr.bf16.mxu0 0
      %1062 = vmatpush1.bf16.msra.mxu0 %v965
      %1063 = vmatprep.subr.bf16.mxu0 0
      %1064 = vmatpush1.bf16.msra.mxu0 %v966
      %1065 = vmatprep.subr.bf16.mxu0 0
      %1066 = vmatpush1.bf16.msra.mxu0 %v967
      %1067 = vmatprep.subr.bf16.mxu0 0
      %1068 = vmatpush1.bf16.msra.mxu0 %v968
      %1069 = vmatprep.subr.bf16.mxu0 0
      %1070 = vmatpush1.bf16.msra.mxu0 %v969
      %1071 = vmatprep.subr.bf16.mxu0 0
      %1072 = vmatpush1.bf16.msra.mxu0 %v970
      %1073 = vmatprep.subr.bf16.mxu0 0
      %1074 = vmatpush1.bf16.msra.mxu0 %v971
      %1075 = vmatprep.subr.bf16.mxu0 0
      %1076 = vmatpush1.bf16.msra.mxu0 %v972
      %1077 = vmatprep.subr.bf16.mxu0 0
      %1078 = vmatpush1.bf16.msra.mxu0 %v973
      %1079 = vmatprep.subr.bf16.mxu0 0
      %1080 = vmatpush1.bf16.msra.mxu0 %v974
      %1081 = vmatprep.subr.bf16.mxu0 0
      %1082 = vmatpush1.bf16.msra.mxu0 %v975
      %1083 = vmatprep.subr.bf16.mxu0 0
      %1084 = vmatpush1.bf16.msra.mxu0 %v976
      %1085 = vmatprep.subr.bf16.mxu0 0
      %1086 = vmatpush1.bf16.msra.mxu0 %v977
      %1087 = vmatprep.subr.bf16.mxu0 0
      %1088 = vmatpush1.bf16.msra.mxu0 %v978
      %1089 = vmatprep.subr.bf16.mxu0 0
      %1090 = vmatpush1.bf16.msra.mxu0 %v979
      %1091 = vmatprep.subr.bf16.mxu0 0
      %1092 = vmatpush1.bf16.msra.mxu0 %v980
      %1093 = vmatprep.mubr.bf16.mxu0 %v665
      %1094 = vmatmul.mubr.bf16.gmra.mrb[0].mxu0 %v664
      %v1095 = vpop.f32.mrb[0].mxu0
      %v1096 = vadd.f32 %v771, %v1095
      %v1097 = vpop.f32.mrb[0].mxu0
      %v1098 = vpop.f32.mrb[0].mxu0
      %v1099 = vadd.f32 %v771, %v1098
      %v1100 = vpop.f32.mrb[0].mxu0
      %1101 = vdwg.mxu0
      %1102 = vmatprep.subr.bf16.mxu0 0
      %1103 = vmatpush1.bf16.msra.mxu0 %v981
      %1104 = vmatprep.subr.bf16.mxu0 0
      %1105 = vmatpush1.bf16.msra.mxu0 %v982
      %1106 = vmatprep.subr.bf16.mxu0 0
      %1107 = vmatpush1.bf16.msra.mxu0 %v983
      %1108 = vmatprep.subr.bf16.mxu0 0
      %1109 = vmatpush1.bf16.msra.mxu0 %v984
      %1110 = vmatprep.subr.bf16.mxu0 0
      %1111 = vmatpush1.bf16.msra.mxu0 %v985
      %1112 = vmatprep.subr.bf16.mxu0 0
      %1113 = vmatpush1.bf16.msra.mxu0 %v986
      %1114 = vmatprep.subr.bf16.mxu0 0
      %1115 = vmatpush1.bf16.msra.mxu0 %v987
      %1116 = vmatprep.subr.bf16.mxu0 0
      %1117 = vmatpush1.bf16.msra.mxu0 %v988
      %1118 = vmatprep.subr.bf16.mxu0 0
      %1119 = vmatpush1.bf16.msra.mxu0 %v989
      %1120 = vmatprep.subr.bf16.mxu0 0
      %1121 = vmatpush1.bf16.msra.mxu0 %v990
      %1122 = vmatprep.subr.bf16.mxu0 0
      %1123 = vmatpush1.bf16.msra.mxu0 %v991
      %1124 = vmatprep.subr.bf16.mxu0 0
      %1125 = vmatpush1.bf16.msra.mxu0 %v992
      %1126 = vmatprep.subr.bf16.mxu0 0
      %1127 = vmatpush1.bf16.msra.mxu0 %v993
      %1128 = vmatprep.subr.bf16.mxu0 0
      %1129 = vmatpush1.bf16.msra.mxu0 %v994
      %1130 = vmatprep.subr.bf16.mxu0 0
      %1131 = vmatpush1.bf16.msra.mxu0 %v995
      %1132 = vmatprep.subr.bf16.mxu0 0
      %1133 = vmatpush1.bf16.msra.mxu0 %v996
      %1134 = vmatprep.mubr.bf16.mxu0 %v667
      %1135 = vmatmul.mubr.bf16.gmra.mrb[0].mxu0 %v666
      %v1136 = vpop.f32.mrb[0].mxu0
      %v1137 = vadd.f32 %v1096, %v1136
      %v1138 = vpop.f32.mrb[0].mxu0
      %v1139 = vpop.f32.mrb[0].mxu0
      %v1140 = vadd.f32 %v1099, %v1139
      %v1141 = vpop.f32.mrb[0].mxu0
      %1142 = vdwg.mxu0
      %1143 = vmatprep.subr.bf16.mxu0 0
      %1144 = vmatpush1.bf16.msra.mxu0 %v997
      %1145 = vmatprep.subr.bf16.mxu0 0
      %1146 = vmatpush1.bf16.msra.mxu0 %v998
      %1147 = vmatprep.subr.bf16.mxu0 0
      %1148 = vmatpush1.bf16.msra.mxu0 %v999
      %1149 = vmatprep.subr.bf16.mxu0 0
      %1150 = vmatpush1.bf16.msra.mxu0 %v1000
      %1151 = vmatprep.subr.bf16.mxu0 0
      %1152 = vmatpush1.bf16.msra.mxu0 %v1001
      %1153 = vmatprep.subr.bf16.mxu0 0
      %1154 = vmatpush1.bf16.msra.mxu0 %v1002
      %1155 = vmatprep.subr.bf16.mxu0 0
      %1156 = vmatpush1.bf16.msra.mxu0 %v1003
      %1157 = vmatprep.subr.bf16.mxu0 0
      %1158 = vmatpush1.bf16.msra.mxu0 %v1004
      %1159 = vmatprep.subr.bf16.mxu0 0
      %1160 = vmatpush1.bf16.msra.mxu0 %v1005
      %1161 = vmatprep.subr.bf16.mxu0 0
      %1162 = vmatpush1.bf16.msra.mxu0 %v1006
      %1163 = vmatprep.subr.bf16.mxu0 0
      %1164 = vmatpush1.bf16.msra.mxu0 %v1007
      %1165 = vmatprep.subr.bf16.mxu0 0
      %1166 = vmatpush1.bf16.msra.mxu0 %v1008
      %1167 = vmatprep.subr.bf16.mxu0 0
      %1168 = vmatpush1.bf16.msra.mxu0 %v1009
      %1169 = vmatprep.subr.bf16.mxu0 0
      %1170 = vmatpush1.bf16.msra.mxu0 %v1010
      %1171 = vmatprep.subr.bf16.mxu0 0
      %1172 = vmatpush1.bf16.msra.mxu0 %v1011
      %1173 = vmatprep.subr.bf16.mxu0 0
      %1174 = vmatpush1.bf16.msra.mxu0 %v1012
      %1175 = vmatprep.mubr.bf16.mxu0 %v669
      %1176 = vmatmul.mubr.bf16.gmra.mrb[0].mxu0 %v668
      %v1177 = vpop.f32.mrb[0].mxu0
      %v1178 = vadd.f32 %v1137, %v1177
      %v1179 = vpop.f32.mrb[0].mxu0
      %v1180 = vpop.f32.mrb[0].mxu0
      %v1181 = vadd.f32 %v1140, %v1180
      %v1182 = vpop.f32.mrb[0].mxu0
      %1183 = vdwg.mxu0
      %vm1184 = vcmp.gt.f32.partialorder %v1178, 0.0
      %vm1185 = vcmp.gt.f32.partialorder %v1181, 0.0
      %v1186 = vmul.f32 %v1178, 1.442695
      %v1187 = vpow.pop %v1186
      %v1188 = vmul.f32 %v1181, 1.442695
      %v1189 = vpow.pop %v1188
      %v1190 = vsub.f32 %v1187, 1.0
      %v1191 = vsub.f32 %v1189, 1.0
      %v1192 = vsel %vm1184, %v1178, %v1190
      %v1193 = vsel %vm1185, %v1181, %v1191
      %v1194 = vpack.c.bf16 %v1193, %v1192
      %v1195 = vld [vmem:[%s5] sm:$0xf]
      %v1196 = vld [vmem:[%s5 + $0x4] sm:$0xf]
      %v1197 = vld [vmem:[%s5 + $0x8] sm:$0xf]
      %v1198 = vld [vmem:[%s5 + $0xc] sm:$0xf]
      %v1199 = vld [vmem:[%s5 + $0x10] sm:$0xf]
      %v1200 = vld [vmem:[%s5 + $0x14] sm:$0xf]
      %v1201 = vld [vmem:[%s5 + $0x18] sm:$0xf]
      %v1202 = vld [vmem:[%s5 + $0x1c] sm:$0xf]
      %v1203 = vld [vmem:[%s5 + $0x20] sm:$0xf]
      %v1204 = vld [vmem:[%s5 + $0x24] sm:$0xf]
      %v1205 = vld [vmem:[%s5 + $0x28] sm:$0xf]
      %v1206 = vld [vmem:[%s5 + $0x2c] sm:$0xf]
      %v1207 = vld [vmem:[%s5 + $0x30] sm:$0xf]
      %v1208 = vld [vmem:[%s5 + $0x34] sm:$0xf]
      %v1209 = vld [vmem:[%s5 + $0x38] sm:$0xf]
      %v1210 = vld [vmem:[%s5 + $0x3c] sm:$0xf]
      %v1211 = vld [vmem:[%s6] sm:$0xf]
      %v1212 = vld [vmem:[%s6 + $0x4] sm:$0xf]
      %v1213 = vld [vmem:[%s6 + $0x8] sm:$0xf]
      %v1214 = vld [vmem:[%s6 + $0xc] sm:$0xf]
      %v1219 = vunpack.c.l.b16 %v1211
      %v1220 = vunpack.c.l.b16 %v1212
      %v1221 = vunpack.c.l.b16 %v1213
      %v1222 = vunpack.c.l.b16 %v1214
      %v1223 = vpack.c.b16 %v1220, %v1219
      %v1224 = vpack.c.b16 %v1222, %v1221
      %1227 = vmatprep.subr.bf16.mxu0 0
      %1228 = vmatpush1.bf16.msra.mxu0 %v1223
      %1229 = vmatprep.subr.bf16.mxu0 0
      %1230 = vmatpush1.bf16.msra.mxu0 %v1224
      %1231 = vmatprep.subr.bf16.mxu0 0
      %1232 = vmatpush1.bf16.msra.mxu0 0
      %1233 = vmatprep.subr.bf16.mxu0 0
      %1234 = vmatpush1.bf16.msra.mxu0 0
      %1235 = vmatprep.subr.bf16.mxu0 0
      %1236 = vmatpush1.bf16.msra.mxu0 0
      %1237 = vmatprep.subr.bf16.mxu0 0
      %1238 = vmatpush1.bf16.msra.mxu0 0
      %1239 = vmatprep.subr.bf16.mxu0 0
      %1240 = vmatpush1.bf16.msra.mxu0 0
      %1241 = vmatprep.subr.bf16.mxu0 0
      %1242 = vmatpush1.bf16.msra.mxu0 0
      %1243 = vmatprep.subr.bf16.mxu0 0
      %1244 = vmatpush1.bf16.msra.mxu0 0
      %1245 = vmatprep.subr.bf16.mxu0 0
      %1246 = vmatpush1.bf16.msra.mxu0 0
      %1247 = vmatprep.subr.bf16.mxu0 0
      %1248 = vmatpush1.bf16.msra.mxu0 0
      %1249 = vmatprep.subr.bf16.mxu0 0
      %1250 = vmatpush1.bf16.msra.mxu0 0
      %1251 = vmatprep.subr.bf16.mxu0 0
      %1252 = vmatpush1.bf16.msra.mxu0 0
      %1253 = vmatprep.subr.bf16.mxu0 0
      %1254 = vmatpush1.bf16.msra.mxu0 0
      %1255 = vmatprep.subr.bf16.mxu0 0
      %1256 = vmatpush1.bf16.msra.mxu0 0
      %1257 = vmatprep.subr.bf16.mxu0 0
      %1258 = vmatpush1.bf16.msra.mxu0 0
      %1259 = vmatprep.mubr.bf16.mxu0 0
      %1260 = vmatmul.mubr.bf16.gmra.mrb[0].mxu0 %v473
      %v1261 = vpop.f32.mrb[0].mxu0
      %v1262 = vadd.f32 0.0, %v1261
      %v1263 = vpop.f32.mrb[0].mxu0
      %v1264 = vpop.f32.mrb[0].mxu0
      %v1265 = vadd.f32 0.0, %v1264
      %v1266 = vpop.f32.mrb[0].mxu0
      %1267 = vdwg.mxu0
      %v1284 = vunpack.c.l.b16 %v1195
      %v1285 = vunpack.c.l.b16 %v1196
      %v1286 = vunpack.c.l.b16 %v1197
      %v1287 = vunpack.c.l.b16 %v1198
      %v1288 = vunpack.c.l.b16 %v1199
      %v1289 = vunpack.c.l.b16 %v1200
      %v1290 = vunpack.c.l.b16 %v1201
      %v1291 = vunpack.c.l.b16 %v1202
      %v1292 = vunpack.c.l.b16 %v1203
      %v1293 = vunpack.c.l.b16 %v1204
      %v1294 = vunpack.c.l.b16 %v1205
      %v1295 = vunpack.c.l.b16 %v1206
      %v1296 = vunpack.c.l.b16 %v1207
      %v1297 = vunpack.c.l.b16 %v1208
      %v1298 = vunpack.c.l.b16 %v1209
      %v1299 = vunpack.c.l.b16 %v1210
      %v1300 = vpack.c.b16 %v1285, %v1284
      %v1301 = vpack.c.b16 %v1287, %v1286
      %v1302 = vpack.c.b16 %v1289, %v1288
      %v1303 = vpack.c.b16 %v1291, %v1290
      %v1304 = vpack.c.b16 %v1293, %v1292
      %v1305 = vpack.c.b16 %v1295, %v1294
      %v1306 = vpack.c.b16 %v1297, %v1296
      %v1307 = vpack.c.b16 %v1299, %v1298
      %1316 = vmatprep.subr.bf16.mxu0 0
      %1317 = vmatpush1.bf16.msra.mxu0 %v1300
      %1318 = vmatprep.subr.bf16.mxu0 0
      %1319 = vmatpush1.bf16.msra.mxu0 %v1301
      %1320 = vmatprep.subr.bf16.mxu0 0
      %1321 = vmatpush1.bf16.msra.mxu0 %v1302
      %1322 = vmatprep.subr.bf16.mxu0 0
      %1323 = vmatpush1.bf16.msra.mxu0 %v1303
      %1324 = vmatprep.subr.bf16.mxu0 0
      %1325 = vmatpush1.bf16.msra.mxu0 %v1304
      %1326 = vmatprep.subr.bf16.mxu0 0
      %1327 = vmatpush1.bf16.msra.mxu0 %v1305
      %1328 = vmatprep.subr.bf16.mxu0 0
      %1329 = vmatpush1.bf16.msra.mxu0 %v1306
      %1330 = vmatprep.subr.bf16.mxu0 0
      %1331 = vmatpush1.bf16.msra.mxu0 %v1307
      %1332 = vmatprep.subr.bf16.mxu0 0
      %1333 = vmatpush1.bf16.msra.mxu0 0
      %1334 = vmatprep.subr.bf16.mxu0 0
      %1335 = vmatpush1.bf16.msra.mxu0 0
      %1336 = vmatprep.subr.bf16.mxu0 0
      %1337 = vmatpush1.bf16.msra.mxu0 0
      %1338 = vmatprep.subr.bf16.mxu0 0
      %1339 = vmatpush1.bf16.msra.mxu0 0
      %1340 = vmatprep.subr.bf16.mxu0 0
      %1341 = vmatpush1.bf16.msra.mxu0 0
      %1342 = vmatprep.subr.bf16.mxu0 0
      %1343 = vmatpush1.bf16.msra.mxu0 0
      %1344 = vmatprep.subr.bf16.mxu0 0
      %1345 = vmatpush1.bf16.msra.mxu0 0
      %1346 = vmatprep.subr.bf16.mxu0 0
      %1347 = vmatpush1.bf16.msra.mxu0 0
      %1348 = vmatprep.mubr.bf16.mxu0 0
      %1349 = vmatmul.mubr.bf16.gmra.mrb[0].mxu0 %v1194
      %v1350 = vpop.f32.mrb[0].mxu0
      %v1351 = vadd.f32 %v1262, %v1350
      %v1352 = vpop.f32.mrb[0].mxu0
      %v1353 = vpop.f32.mrb[0].mxu0
      %v1354 = vadd.f32 %v1265, %v1353
      %v1355 = vpop.f32.mrb[0].mxu0
      %1356 = vdwg.mxu0
      %v1357 = vld [vmem:[%s7] sm:$0x1]
      %v1359 = vlaneseq
      %v1360 = vshrl.u32 %v1359, 7
      %v1361 = vsub.s32 0, %v1360
      %v1362 = vrot.slane %v1357, %v1361
      %v1364 = vadd.f32 %v1351, %v1362
      %v1365 = vadd.f32 %v1354, %v1362
      %vm1366 = vcmp.gt.f32.partialorder %v1364, 0.0
      %vm1367 = vcmp.gt.f32.partialorder %v1365, 0.0
      %v1368 = vmul.f32 %v1364, 1.442695
      %v1369 = vpow.pop %v1368
      %v1370 = vmul.f32 %v1365, 1.442695
      %v1371 = vpow.pop %v1370
      %v1372 = vsub.f32 %v1369, 1.0
      %v1373 = vsub.f32 %v1371, 1.0
      %v1374 = vsel %vm1366, %v1364, %v1372
      %v1375 = vsel %vm1367, %v1365, %v1373
      %v1376 = vpack.c.bf16 %v1375, %v1374
      %v1377 = vld [vmem:[%s8] sm:$0xf]
      %v1378 = vld [vmem:[%s8 + $0x4] sm:$0xf]
      %v1379 = vld [vmem:[%s8 + $0x8] sm:$0xf]
      %v1380 = vld [vmem:[%s8 + $0xc] sm:$0xf]
      %v1381 = vld [vmem:[%s8 + $0x10] sm:$0xf]
      %v1382 = vld [vmem:[%s8 + $0x14] sm:$0xf]
      %v1383 = vld [vmem:[%s8 + $0x18] sm:$0xf]
      %v1384 = vld [vmem:[%s8 + $0x1c] sm:$0xf]
      %v1385 = vld [vmem:[%s8 + $0x20] sm:$0xf]
      %v1386 = vld [vmem:[%s8 + $0x24] sm:$0xf]
      %v1387 = vld [vmem:[%s8 + $0x28] sm:$0xf]
      %v1388 = vld [vmem:[%s8 + $0x2c] sm:$0xf]
      %v1389 = vld [vmem:[%s8 + $0x30] sm:$0xf]
      %v1390 = vld [vmem:[%s8 + $0x34] sm:$0xf]
      %v1391 = vld [vmem:[%s8 + $0x38] sm:$0xf]
      %v1392 = vld [vmem:[%s8 + $0x3c] sm:$0xf]
      %v1393 = vld [vmem:[%s9] sm:$0x1]
      %v1395 = vlaneseq
      %v1396 = vshrl.u32 %v1395, 7
      %v1397 = vsub.s32 0, %v1396
      %v1398 = vrot.slane %v1393, %v1397
      %v1416 = vunpack.c.l.b16 %v1377
      %v1417 = vunpack.c.l.b16 %v1378
      %v1418 = vunpack.c.l.b16 %v1379
      %v1419 = vunpack.c.l.b16 %v1380
      %v1420 = vunpack.c.l.b16 %v1381
      %v1421 = vunpack.c.l.b16 %v1382
      %v1422 = vunpack.c.l.b16 %v1383
      %v1423 = vunpack.c.l.b16 %v1384
      %v1424 = vunpack.c.l.b16 %v1385
      %v1425 = vunpack.c.l.b16 %v1386
      %v1426 = vunpack.c.l.b16 %v1387
      %v1427 = vunpack.c.l.b16 %v1388
      %v1428 = vunpack.c.l.b16 %v1389
      %v1429 = vunpack.c.l.b16 %v1390
      %v1430 = vunpack.c.l.b16 %v1391
      %v1431 = vunpack.c.l.b16 %v1392
      %v1432 = vpack.c.b16 %v1417, %v1416
      %v1433 = vpack.c.b16 %v1419, %v1418
      %v1434 = vpack.c.b16 %v1421, %v1420
      %v1435 = vpack.c.b16 %v1423, %v1422
      %v1436 = vpack.c.b16 %v1425, %v1424
      %v1437 = vpack.c.b16 %v1427, %v1426
      %v1438 = vpack.c.b16 %v1429, %v1428
      %v1439 = vpack.c.b16 %v1431, %v1430
      %1448 = vmatprep.subr.bf16.mxu0 0
      %1449 = vmatpush1.bf16.msra.mxu0 %v1432
      %1450 = vmatprep.subr.bf16.mxu0 0
      %1451 = vmatpush1.bf16.msra.mxu0 %v1433
      %1452 = vmatprep.subr.bf16.mxu0 0
      %1453 = vmatpush1.bf16.msra.mxu0 %v1434
      %1454 = vmatprep.subr.bf16.mxu0 0
      %1455 = vmatpush1.bf16.msra.mxu0 %v1435
      %1456 = vmatprep.subr.bf16.mxu0 0
      %1457 = vmatpush1.bf16.msra.mxu0 %v1436
      %1458 = vmatprep.subr.bf16.mxu0 0
      %1459 = vmatpush1.bf16.msra.mxu0 %v1437
      %1460 = vmatprep.subr.bf16.mxu0 0
      %1461 = vmatpush1.bf16.msra.mxu0 %v1438
      %1462 = vmatprep.subr.bf16.mxu0 0
      %1463 = vmatpush1.bf16.msra.mxu0 %v1439
      %1464 = vmatprep.subr.bf16.mxu0 0
      %1465 = vmatpush1.bf16.msra.mxu0 0
      %1466 = vmatprep.subr.bf16.mxu0 0
      %1467 = vmatpush1.bf16.msra.mxu0 0
      %1468 = vmatprep.subr.bf16.mxu0 0
      %1469 = vmatpush1.bf16.msra.mxu0 0
      %1470 = vmatprep.subr.bf16.mxu0 0
      %1471 = vmatpush1.bf16.msra.mxu0 0
      %1472 = vmatprep.subr.bf16.mxu0 0
      %1473 = vmatpush1.bf16.msra.mxu0 0
      %1474 = vmatprep.subr.bf16.mxu0 0
      %1475 = vmatpush1.bf16.msra.mxu0 0
      %1476 = vmatprep.subr.bf16.mxu0 0
      %1477 = vmatpush1.bf16.msra.mxu0 0
      %1478 = vmatprep.subr.bf16.mxu0 0
      %1479 = vmatpush1.bf16.msra.mxu0 0
      %1480 = vmatprep.mubr.bf16.mxu0 0
      %1481 = vmatmul.mubr.bf16.gmra.mrb[0].mxu0 %v1376
      %v1482 = vpop.f32.mrb[0].mxu0
      %v1483 = vadd.f32 %v1398, %v1482
      %v1484 = vpop.f32.mrb[0].mxu0
      %v1485 = vpop.f32.mrb[0].mxu0
      %v1486 = vadd.f32 %v1398, %v1485
      %v1487 = vpop.f32.mrb[0].mxu0
      %1488 = vdwg.mxu0
      %vm1489 = vcmp.gt.f32.partialorder %v1483, 0.0
      %vm1490 = vcmp.gt.f32.partialorder %v1486, 0.0
      %v1491 = vmul.f32 %v1483, 1.442695
      %v1492 = vpow.pop %v1491
      %v1493 = vmul.f32 %v1486, 1.442695
      %v1494 = vpow.pop %v1493
      %v1495 = vsub.f32 %v1492, 1.0
      %v1496 = vsub.f32 %v1494, 1.0
      %v1497 = vsel %vm1489, %v1483, %v1495
      %v1498 = vsel %vm1490, %v1486, %v1496
      %v1499 = vpack.c.bf16 %v1498, %v1497
      %s1500 = scalar_lea.vmem %s8, 64
      %v1501 = vld [vmem:[%s1500] sm:$0xf]
      %v1502 = vld [vmem:[%s1500 + $0x4] sm:$0xf]
      %v1503 = vld [vmem:[%s1500 + $0x8] sm:$0xf]
      %v1504 = vld [vmem:[%s1500 + $0xc] sm:$0xf]
      %v1505 = vld [vmem:[%s1500 + $0x10] sm:$0xf]
      %v1506 = vld [vmem:[%s1500 + $0x14] sm:$0xf]
      %v1507 = vld [vmem:[%s1500 + $0x18] sm:$0xf]
      %v1508 = vld [vmem:[%s1500 + $0x1c] sm:$0xf]
      %v1509 = vld [vmem:[%s1500 + $0x20] sm:$0xf]
      %v1510 = vld [vmem:[%s1500 + $0x24] sm:$0xf]
      %v1511 = vld [vmem:[%s1500 + $0x28] sm:$0xf]
      %v1512 = vld [vmem:[%s1500 + $0x2c] sm:$0xf]
      %v1513 = vld [vmem:[%s1500 + $0x30] sm:$0xf]
      %v1514 = vld [vmem:[%s1500 + $0x34] sm:$0xf]
      %v1515 = vld [vmem:[%s1500 + $0x38] sm:$0xf]
      %v1516 = vld [vmem:[%s1500 + $0x3c] sm:$0xf]
      %s1517 = scalar_lea.vmem %s9, 1
      %v1518 = vld [vmem:[%s1517] sm:$0x1]
      %v1520 = vlaneseq
      %v1521 = vshrl.u32 %v1520, 7
      %v1522 = vsub.s32 0, %v1521
      %v1523 = vrot.slane %v1518, %v1522
      %v1541 = vunpack.c.l.b16 %v1501
      %v1542 = vunpack.c.l.b16 %v1502
      %v1543 = vunpack.c.l.b16 %v1503
      %v1544 = vunpack.c.l.b16 %v1504
      %v1545 = vunpack.c.l.b16 %v1505
      %v1546 = vunpack.c.l.b16 %v1506
      %v1547 = vunpack.c.l.b16 %v1507
      %v1548 = vunpack.c.l.b16 %v1508
      %v1549 = vunpack.c.l.b16 %v1509
      %v1550 = vunpack.c.l.b16 %v1510
      %v1551 = vunpack.c.l.b16 %v1511
      %v1552 = vunpack.c.l.b16 %v1512
      %v1553 = vunpack.c.l.b16 %v1513
      %v1554 = vunpack.c.l.b16 %v1514
      %v1555 = vunpack.c.l.b16 %v1515
      %v1556 = vunpack.c.l.b16 %v1516
      %v1557 = vpack.c.b16 %v1542, %v1541
      %v1558 = vpack.c.b16 %v1544, %v1543
      %v1559 = vpack.c.b16 %v1546, %v1545
      %v1560 = vpack.c.b16 %v1548, %v1547
      %v1561 = vpack.c.b16 %v1550, %v1549
      %v1562 = vpack.c.b16 %v1552, %v1551
      %v1563 = vpack.c.b16 %v1554, %v1553
      %v1564 = vpack.c.b16 %v1556, %v1555
      %1573 = vmatprep.subr.bf16.mxu0 0
      %1574 = vmatpush1.bf16.msra.mxu0 %v1557
      %1575 = vmatprep.subr.bf16.mxu0 0
      %1576 = vmatpush1.bf16.msra.mxu0 %v1558
      %1577 = vmatprep.subr.bf16.mxu0 0
      %1578 = vmatpush1.bf16.msra.mxu0 %v1559
      %1579 = vmatprep.subr.bf16.mxu0 0
      %1580 = vmatpush1.bf16.msra.mxu0 %v1560
      %1581 = vmatprep.subr.bf16.mxu0 0
      %1582 = vmatpush1.bf16.msra.mxu0 %v1561
      %1583 = vmatprep.subr.bf16.mxu0 0
      %1584 = vmatpush1.bf16.msra.mxu0 %v1562
      %1585 = vmatprep.subr.bf16.mxu0 0
      %1586 = vmatpush1.bf16.msra.mxu0 %v1563
      %1587 = vmatprep.subr.bf16.mxu0 0
      %1588 = vmatpush1.bf16.msra.mxu0 %v1564
      %1589 = vmatprep.subr.bf16.mxu0 0
      %1590 = vmatpush1.bf16.msra.mxu0 0
      %1591 = vmatprep.subr.bf16.mxu0 0
      %1592 = vmatpush1.bf16.msra.mxu0 0
      %1593 = vmatprep.subr.bf16.mxu0 0
      %1594 = vmatpush1.bf16.msra.mxu0 0
      %1595 = vmatprep.subr.bf16.mxu0 0
      %1596 = vmatpush1.bf16.msra.mxu0 0
      %1597 = vmatprep.subr.bf16.mxu0 0
      %1598 = vmatpush1.bf16.msra.mxu0 0
      %1599 = vmatprep.subr.bf16.mxu0 0
      %1600 = vmatpush1.bf16.msra.mxu0 0
      %1601 = vmatprep.subr.bf16.mxu0 0
      %1602 = vmatpush1.bf16.msra.mxu0 0
      %1603 = vmatprep.subr.bf16.mxu0 0
      %1604 = vmatpush1.bf16.msra.mxu0 0
      %1605 = vmatprep.mubr.bf16.mxu0 0
      %1606 = vmatmul.mubr.bf16.gmra.mrb[0].mxu0 %v1499
      %v1607 = vpop.f32.mrb[0].mxu0
      %v1608 = vadd.f32 %v1523, %v1607
      %v1609 = vpop.f32.mrb[0].mxu0
      %v1610 = vpop.f32.mrb[0].mxu0
      %v1611 = vadd.f32 %v1523, %v1610
      %v1612 = vpop.f32.mrb[0].mxu0
      %1613 = vdwg.mxu0
      %vm1614 = vcmp.gt.f32.partialorder %v1608, 0.0
      %vm1615 = vcmp.gt.f32.partialorder %v1611, 0.0
      %v1616 = vmul.f32 %v1608, 1.442695
      %v1617 = vpow.pop %v1616
      %v1618 = vmul.f32 %v1611, 1.442695
      %v1619 = vpow.pop %v1618
      %v1620 = vsub.f32 %v1617, 1.0
      %v1621 = vsub.f32 %v1619, 1.0
      %v1622 = vsel %vm1614, %v1608, %v1620
      %v1623 = vsel %vm1615, %v1611, %v1621
      %v1624 = vpack.c.bf16 %v1623, %v1622
      %s1625 = scalar_lea.vmem %s8, 128
      %v1626 = vld [vmem:[%s1625] sm:$0xf]
      %v1627 = vld [vmem:[%s1625 + $0x4] sm:$0xf]
      %v1628 = vld [vmem:[%s1625 + $0x8] sm:$0xf]
      %v1629 = vld [vmem:[%s1625 + $0xc] sm:$0xf]
      %v1630 = vld [vmem:[%s1625 + $0x10] sm:$0xf]
      %v1631 = vld [vmem:[%s1625 + $0x14] sm:$0xf]
      %v1632 = vld [vmem:[%s1625 + $0x18] sm:$0xf]
      %v1633 = vld [vmem:[%s1625 + $0x1c] sm:$0xf]
      %v1634 = vld [vmem:[%s1625 + $0x20] sm:$0xf]
      %v1635 = vld [vmem:[%s1625 + $0x24] sm:$0xf]
      %v1636 = vld [vmem:[%s1625 + $0x28] sm:$0xf]
      %v1637 = vld [vmem:[%s1625 + $0x2c] sm:$0xf]
      %v1638 = vld [vmem:[%s1625 + $0x30] sm:$0xf]
      %v1639 = vld [vmem:[%s1625 + $0x34] sm:$0xf]
      %v1640 = vld [vmem:[%s1625 + $0x38] sm:$0xf]
      %v1641 = vld [vmem:[%s1625 + $0x3c] sm:$0xf]
      %s1642 = scalar_lea.vmem %s9, 2
      %v1643 = vld [vmem:[%s1642] sm:$0x1]
      %v1645 = vlaneseq
      %v1646 = vshrl.u32 %v1645, 7
      %v1647 = vsub.s32 0, %v1646
      %v1648 = vrot.slane %v1643, %v1647
      %v1666 = vunpack.c.l.b16 %v1626
      %v1667 = vunpack.c.l.b16 %v1627
      %v1668 = vunpack.c.l.b16 %v1628
      %v1669 = vunpack.c.l.b16 %v1629
      %v1670 = vunpack.c.l.b16 %v1630
      %v1671 = vunpack.c.l.b16 %v1631
      %v1672 = vunpack.c.l.b16 %v1632
      %v1673 = vunpack.c.l.b16 %v1633
      %v1674 = vunpack.c.l.b16 %v1634
      %v1675 = vunpack.c.l.b16 %v1635
      %v1676 = vunpack.c.l.b16 %v1636
      %v1677 = vunpack.c.l.b16 %v1637
      %v1678 = vunpack.c.l.b16 %v1638
      %v1679 = vunpack.c.l.b16 %v1639
      %v1680 = vunpack.c.l.b16 %v1640
      %v1681 = vunpack.c.l.b16 %v1641
      %v1682 = vpack.c.b16 %v1667, %v1666
      %v1683 = vpack.c.b16 %v1669, %v1668
      %v1684 = vpack.c.b16 %v1671, %v1670
      %v1685 = vpack.c.b16 %v1673, %v1672
      %v1686 = vpack.c.b16 %v1675, %v1674
      %v1687 = vpack.c.b16 %v1677, %v1676
      %v1688 = vpack.c.b16 %v1679, %v1678
      %v1689 = vpack.c.b16 %v1681, %v1680
      %1698 = vmatprep.subr.bf16.mxu0 0
      %1699 = vmatpush1.bf16.msra.mxu0 %v1682
      %1700 = vmatprep.subr.bf16.mxu0 0
      %1701 = vmatpush1.bf16.msra.mxu0 %v1683
      %1702 = vmatprep.subr.bf16.mxu0 0
      %1703 = vmatpush1.bf16.msra.mxu0 %v1684
      %1704 = vmatprep.subr.bf16.mxu0 0
      %1705 = vmatpush1.bf16.msra.mxu0 %v1685
      %1706 = vmatprep.subr.bf16.mxu0 0
      %1707 = vmatpush1.bf16.msra.mxu0 %v1686
      %1708 = vmatprep.subr.bf16.mxu0 0
      %1709 = vmatpush1.bf16.msra.mxu0 %v1687
      %1710 = vmatprep.subr.bf16.mxu0 0
      %1711 = vmatpush1.bf16.msra.mxu0 %v1688
      %1712 = vmatprep.subr.bf16.mxu0 0
      %1713 = vmatpush1.bf16.msra.mxu0 %v1689
      %1714 = vmatprep.subr.bf16.mxu0 0
      %1715 = vmatpush1.bf16.msra.mxu0 0
      %1716 = vmatprep.subr.bf16.mxu0 0
      %1717 = vmatpush1.bf16.msra.mxu0 0
      %1718 = vmatprep.subr.bf16.mxu0 0
      %1719 = vmatpush1.bf16.msra.mxu0 0
      %1720 = vmatprep.subr.bf16.mxu0 0
      %1721 = vmatpush1.bf16.msra.mxu0 0
      %1722 = vmatprep.subr.bf16.mxu0 0
      %1723 = vmatpush1.bf16.msra.mxu0 0
      %1724 = vmatprep.subr.bf16.mxu0 0
      %1725 = vmatpush1.bf16.msra.mxu0 0
      %1726 = vmatprep.subr.bf16.mxu0 0
      %1727 = vmatpush1.bf16.msra.mxu0 0
      %1728 = vmatprep.subr.bf16.mxu0 0
      %1729 = vmatpush1.bf16.msra.mxu0 0
      %1730 = vmatprep.mubr.bf16.mxu0 0
      %1731 = vmatmul.mubr.bf16.gmra.mrb[0].mxu0 %v1624
      %v1732 = vpop.f32.mrb[0].mxu0
      %v1733 = vadd.f32 %v1648, %v1732
      %v1734 = vpop.f32.mrb[0].mxu0
      %v1735 = vpop.f32.mrb[0].mxu0
      %v1736 = vadd.f32 %v1648, %v1735
      %v1737 = vpop.f32.mrb[0].mxu0
      %1738 = vdwg.mxu0
      %vm1739 = vcmp.gt.f32.partialorder %v1733, 0.0
      %vm1740 = vcmp.gt.f32.partialorder %v1736, 0.0
      %v1741 = vmul.f32 %v1733, 1.442695
      %v1742 = vpow.pop %v1741
      %v1743 = vmul.f32 %v1736, 1.442695
      %v1744 = vpow.pop %v1743
      %v1745 = vsub.f32 %v1742, 1.0
      %v1746 = vsub.f32 %v1744, 1.0
      %v1747 = vsel %vm1739, %v1733, %v1745
      %v1748 = vsel %vm1740, %v1736, %v1746
      %v1749 = vpack.c.bf16 %v1748, %v1747
      %s1750 = scalar_lea.vmem %s8, 192
      %v1751 = vld [vmem:[%s1750] sm:$0xf]
      %v1752 = vld [vmem:[%s1750 + $0x4] sm:$0xf]
      %v1753 = vld [vmem:[%s1750 + $0x8] sm:$0xf]
      %v1754 = vld [vmem:[%s1750 + $0xc] sm:$0xf]
      %v1755 = vld [vmem:[%s1750 + $0x10] sm:$0xf]
      %v1756 = vld [vmem:[%s1750 + $0x14] sm:$0xf]
      %v1757 = vld [vmem:[%s1750 + $0x18] sm:$0xf]
      %v1758 = vld [vmem:[%s1750 + $0x1c] sm:$0xf]
      %v1759 = vld [vmem:[%s1750 + $0x20] sm:$0xf]
      %v1760 = vld [vmem:[%s1750 + $0x24] sm:$0xf]
      %v1761 = vld [vmem:[%s1750 + $0x28] sm:$0xf]
      %v1762 = vld [vmem:[%s1750 + $0x2c] sm:$0xf]
      %v1763 = vld [vmem:[%s1750 + $0x30] sm:$0xf]
      %v1764 = vld [vmem:[%s1750 + $0x34] sm:$0xf]
      %v1765 = vld [vmem:[%s1750 + $0x38] sm:$0xf]
      %v1766 = vld [vmem:[%s1750 + $0x3c] sm:$0xf]
      %s1767 = scalar_lea.vmem %s9, 3
      %v1768 = vld [vmem:[%s1767] sm:$0x1]
      %v1770 = vlaneseq
      %v1771 = vshrl.u32 %v1770, 7
      %v1772 = vsub.s32 0, %v1771
      %v1773 = vrot.slane %v1768, %v1772
      %v1791 = vunpack.c.l.b16 %v1751
      %v1792 = vunpack.c.l.b16 %v1752
      %v1793 = vunpack.c.l.b16 %v1753
      %v1794 = vunpack.c.l.b16 %v1754
      %v1795 = vunpack.c.l.b16 %v1755
      %v1796 = vunpack.c.l.b16 %v1756
      %v1797 = vunpack.c.l.b16 %v1757
      %v1798 = vunpack.c.l.b16 %v1758
      %v1799 = vunpack.c.l.b16 %v1759
      %v1800 = vunpack.c.l.b16 %v1760
      %v1801 = vunpack.c.l.b16 %v1761
      %v1802 = vunpack.c.l.b16 %v1762
      %v1803 = vunpack.c.l.b16 %v1763
      %v1804 = vunpack.c.l.b16 %v1764
      %v1805 = vunpack.c.l.b16 %v1765
      %v1806 = vunpack.c.l.b16 %v1766
      %v1807 = vpack.c.b16 %v1792, %v1791
      %v1808 = vpack.c.b16 %v1794, %v1793
      %v1809 = vpack.c.b16 %v1796, %v1795
      %v1810 = vpack.c.b16 %v1798, %v1797
      %v1811 = vpack.c.b16 %v1800, %v1799
      %v1812 = vpack.c.b16 %v1802, %v1801
      %v1813 = vpack.c.b16 %v1804, %v1803
      %v1814 = vpack.c.b16 %v1806, %v1805
      %1823 = vmatprep.subr.bf16.mxu0 0
      %1824 = vmatpush1.bf16.msra.mxu0 %v1807
      %1825 = vmatprep.subr.bf16.mxu0 0
      %1826 = vmatpush1.bf16.msra.mxu0 %v1808
      %1827 = vmatprep.subr.bf16.mxu0 0
      %1828 = vmatpush1.bf16.msra.mxu0 %v1809
      %1829 = vmatprep.subr.bf16.mxu0 0
      %1830 = vmatpush1.bf16.msra.mxu0 %v1810
      %1831 = vmatprep.subr.bf16.mxu0 0
      %1832 = vmatpush1.bf16.msra.mxu0 %v1811
      %1833 = vmatprep.subr.bf16.mxu0 0
      %1834 = vmatpush1.bf16.msra.mxu0 %v1812
      %1835 = vmatprep.subr.bf16.mxu0 0
      %1836 = vmatpush1.bf16.msra.mxu0 %v1813
      %1837 = vmatprep.subr.bf16.mxu0 0
      %1838 = vmatpush1.bf16.msra.mxu0 %v1814
      %1839 = vmatprep.subr.bf16.mxu0 0
      %1840 = vmatpush1.bf16.msra.mxu0 0
      %1841 = vmatprep.subr.bf16.mxu0 0
      %1842 = vmatpush1.bf16.msra.mxu0 0
      %1843 = vmatprep.subr.bf16.mxu0 0
      %1844 = vmatpush1.bf16.msra.mxu0 0
      %1845 = vmatprep.subr.bf16.mxu0 0
      %1846 = vmatpush1.bf16.msra.mxu0 0
      %1847 = vmatprep.subr.bf16.mxu0 0
      %1848 = vmatpush1.bf16.msra.mxu0 0
      %1849 = vmatprep.subr.bf16.mxu0 0
      %1850 = vmatpush1.bf16.msra.mxu0 0
      %1851 = vmatprep.subr.bf16.mxu0 0
      %1852 = vmatpush1.bf16.msra.mxu0 0
      %1853 = vmatprep.subr.bf16.mxu0 0
      %1854 = vmatpush1.bf16.msra.mxu0 0
      %1855 = vmatprep.mubr.bf16.mxu0 0
      %1856 = vmatmul.mubr.bf16.gmra.mrb[0].mxu0 %v1749
      %v1857 = vpop.f32.mrb[0].mxu0
      %v1858 = vadd.f32 %v1773, %v1857
      %v1859 = vpop.f32.mrb[0].mxu0
      %v1860 = vpop.f32.mrb[0].mxu0
      %v1861 = vadd.f32 %v1773, %v1860
      %v1862 = vpop.f32.mrb[0].mxu0
      %1863 = vdwg.mxu0
      %vm1864 = vcmp.gt.f32.partialorder %v1858, 0.0
      %vm1865 = vcmp.gt.f32.partialorder %v1861, 0.0
      %v1866 = vmul.f32 %v1858, 1.442695
      %v1867 = vpow.pop %v1866
      %v1868 = vmul.f32 %v1861, 1.442695
      %v1869 = vpow.pop %v1868
      %v1870 = vsub.f32 %v1867, 1.0
      %v1871 = vsub.f32 %v1869, 1.0
      %v1872 = vsel %vm1864, %v1858, %v1870
      %v1873 = vsel %vm1865, %v1861, %v1871
      %v1874 = vpack.c.bf16 %v1873, %v1872
      %v1876 = vunpack.c.l.b16 %v1874
      %v1877 = vunpack.c.h.b16 %v1874
      %v1878 = vpack.c.b16 %v1876, %v1876
      %v1879 = vpack.c.b16 %v1877, %v1877
      %1882 = vst [vmem:[%s361] sm:$0xf] %v1878
      %1883 = vst [vmem:[%s361 + $0x4] sm:$0xf] %v1879
      %s1884 = smul.u32 2, %s21
      %p1885 = scmp.lt.s32.totalorder %s1884, 3
      %s1886 = scalar_select %p1885, %s1884, 3
      %s1887 = smul.addr %s1886, 4
      %s1888 = scalar_lea.vmem %s10, %s1887
      // Predicated region
      $region61: #{model_n2n_forward.1} parent=59 // pred_check
        %p1889 = pneg %p254
      $region62: #{model_n2n_forward.1} parent=59 // pred_check_branch
        %1891 = sbr.rel (%p1889) target = $region64
      $region63: #{model_n2n_forward.1} parent=59 // pred_region
        %s1892 = smul.u32 2, %s21
      $region64: #{model_n2n_forward.1} parent=59 // pred_fallthru
        _
    $region60: #{model_n2n_forward.1} parent=5 // pred_fallthru
      _
    %p1893 = scmp.le.s32.totalorder 2, %s16
    // Predicated region
    $region65: #{model_n2n_forward.1} parent=5 // pred_check
      %p1894 = pneg %p1893
    $region66: #{model_n2n_forward.1} parent=5 // pred_check_branch
      %1896 = sbr.rel (%p1894) target = $region68
    $region67: #{model_n2n_forward.1} parent=5 // pred_region
      %s1897 = ssub.s32 %s16, 2
      // Predicated region
      $region69: #{model_n2n_forward.1} parent=67 // pred_check
        %p1898 = pneg %p260
      $region70: #{model_n2n_forward.1} parent=67 // pred_check_branch
        %1900 = sbr.rel (%p1898) target = $region72
      $region71: #{model_n2n_forward.1} parent=67 // pred_region
        %s1901 = smul.u32 2, %s22
        %p1902 = scmp.lt.s32.totalorder %s1901, 3
        %s1903 = scalar_select %p1902, %s1901, 3
        %s1904 = smul.addr %s1903, 4
        %s1905 = scalar_lea.vmem %s10, %s1904
      $region72: #{model_n2n_forward.1} parent=67 // pred_fallthru
        _
    $region68: #{model_n2n_forward.1} parent=5 // pred_fallthru
      _
  $region6: #{model_n2n_forward.1} parent=0 // loop_footer
    %s20 = sadd.s32 1, %s16
  $region7: #{model_n2n_forward.1} parent=0 // loop_footer_branch
    %15 = sbr.rel target = $region3
  $region8: #{model_n2n_forward.1} parent=0 // loop_exit
    _

</llo_original>
